<compile_context>
chip_gen: v5e
topology: v5e:2x2
jax: 0.10.0
libtpu: 0.0.40
codegen_flags: <defaults>
</compile_context>

<pallas_src>
import jax
import jax.numpy as jnp
import numpy as np
from jax import lax
from jax.experimental import pallas as pl
from jax.experimental.pallas import tpu as pltpu

LANE = 128


def _round_up(n, m):
    return ((n + m - 1) // m) * m


def _pad_axis(a, axis, size):
    pad = size - a.shape[axis]
    if pad <= 0:
        return a
    widths = [(0, 0)] * a.ndim
    widths[axis] = (0, pad)
    return jnp.pad(a, widths)


# ----------------------------------------------------------------------------
# Kernel 1: theta / phi / g projections (1x1 convs == row-wise matmuls).
#   x_ref : (1, TP, Cpad)  channels-last input tile
#   w*    : (Cpad, Cmpad)  bf16 weights (already transposed / padded)
#   b*    : (1, Cmpad)     f32 biases
#   outs  : (1, TP, Cmpad) bf16 theta / phi / g tiles
# ----------------------------------------------------------------------------
def _proj_kernel(x_ref, wt_ref, bt_ref, wp_ref, bp_ref, wg_ref, bg_ref,
                 theta_ref, phi_ref, g_ref):
    x = x_ref[0].astype(jnp.bfloat16)                 # bf16 MXU operand

    def proj(w_ref, b_ref, o_ref):
        r = jnp.dot(x, w_ref[...], preferred_element_type=jnp.float32)
        o_ref[0] = (r + b_ref[...]).astype(o_ref.dtype)

    proj(wt_ref, bt_ref, theta_ref)
    proj(wp_ref, bp_ref, phi_ref)
    proj(wg_ref, bg_ref, g_ref)


# ----------------------------------------------------------------------------
# Kernel 2: flash-style embedded-Gaussian attention + folded W_z/BN + residual.
# grid = (B, n_q, n_k), key axis innermost ("arbitrary").
#   theta_ref : (1, TQ, Cmpad) bf16     phi_ref / g_ref : (1, TK, Cmpad) bf16
#   x_ref     : (1, TQ, Cpad)  residual tile
#   wz_ref    : (Cmpad, Cpad)  bf16  (W_z^T with eval-BN scale folded in)
#   bz_ref    : (1, Cpad)      f32   (folded bias)
#   out_ref   : (1, TQ, Cpad)
#   scratch   : m (TQ,1), l (TQ,1), acc (TQ, Cmpad)  -- f32 online-softmax state
# ----------------------------------------------------------------------------
def _attn_kernel(theta_ref, phi_ref, g_ref, x_ref, wz_ref, bz_ref, out_ref,
                 m_sc, l_sc, acc_sc):
    ki = pl.program_id(2)

    @pl.when(ki == 0)
    def _init():
        m_sc[...] = jnp.full(m_sc.shape, -jnp.inf, dtype=m_sc.dtype)
        l_sc[...] = jnp.zeros(l_sc.shape, dtype=l_sc.dtype)
        acc_sc[...] = jnp.zeros(acc_sc.shape, dtype=acc_sc.dtype)

    theta = theta_ref[0]                              # (TQ, Cmpad) bf16
    phi = phi_ref[0]                                  # (TK, Cmpad) bf16
    # scores[q, k] = theta[q] . phi[k]  -- contract last dims, no transpose.
    s = lax.dot_general(theta, phi, (((1,), (1,)), ((), ())),
                        preferred_element_type=jnp.float32)   # (TQ, TK) f32

    # Online softmax (all element-wise math in f32).
    m_prev = m_sc[...]                                # (TQ, 1)
    m_new = jnp.maximum(m_prev, jnp.max(s, axis=-1, keepdims=True))
    alpha = jnp.exp(m_prev - m_new)                   # rescale of old state
    p = jnp.exp(s - m_new)                            # (TQ, TK) f32
    l_sc[...] = alpha * l_sc[...] + jnp.sum(p, axis=-1, keepdims=True)
    pv = jnp.dot(p.astype(jnp.bfloat16), g_ref[0],
                 preferred_element_type=jnp.float32)  # (TQ, Cmpad)
    acc_sc[...] = alpha * acc_sc[...] + pv
    m_sc[...] = m_new

    @pl.when(ki == pl.num_programs(2) - 1)
    def _finalize():
        inv_l = pl.reciprocal(l_sc[...], approx=True)            # EUP slot
        y = (acc_sc[...] * inv_l).astype(jnp.bfloat16)           # (TQ, Cmpad)
        w_y = jnp.dot(y, wz_ref[...],
                      preferred_element_type=jnp.float32)        # (TQ, Cpad)
        w_y = w_y + bz_ref[...]                                  # folded W_z bias + BN
        out_ref[0] = (w_y + x_ref[0].astype(jnp.float32)).astype(out_ref.dtype)


# ----------------------------------------------------------------------------
# Wrapper: NCHW in / NCHW out.
# ----------------------------------------------------------------------------
def nl_block_pallas(x_nchw, params, *, tile_q=128, tile_k=128, tile_p=128,
                    interpret=False):
    B, C, H, W = x_nchw.shape
    HW = H * W
    Cm = params["w_theta"].shape[0]
    if HW % tile_q or HW % tile_k or HW % tile_p:
        # TODO(synk): pad / mask the spatial axis for HW not a multiple of 128.
        raise ValueError("H*W must be a multiple of the spatial tile size")

    c_pad = _round_up(C, LANE)
    cm_pad = _round_up(Cm, LANE)
    f32, bf16 = jnp.float32, jnp.bfloat16

    # NCHW -> channels-last (B, HW, Cpad), zero-padded channels (lane-dense last dim).
    # TODO(synk): a channels-first kernel variant would avoid these two activation
    # transposes, at the cost of lhs-transposed matmuls; acceptable here since the
    # HW^2 attention dominates at realistic sizes.
    x_cl = _pad_axis(jnp.transpose(x_nchw.reshape(B, C, HW), (0, 2, 1)), 2, c_pad)

    # theta/phi/g 1x1-conv weights -> (Cpad, Cmpad) bf16; biases -> (1, Cmpad) f32.
    def prep_w(w):                     # (Cm, C) -> (Cpad, Cmpad)
        return _pad_axis(_pad_axis(w.T.astype(bf16), 0, c_pad), 1, cm_pad)

    def prep_b(b):                     # (Cm,) -> (1, Cmpad)
        return _pad_axis(b.astype(f32)[None, :], 1, cm_pad)

    wt, wp, wg = prep_w(params["w_theta"]), prep_w(params["w_phi"]), prep_w(params["w_g"])
    bt, bp, bg = prep_b(params["b_theta"]), prep_b(params["b_phi"]), prep_b(params["b_g"])

    # Fold eval-mode BatchNorm into the W_z projection:
    #   BN(W_z y + b_z) = y @ (W_z^T * scale) + (b_z*scale + beta - mean*scale)
    inv_std = 1.0 / jnp.sqrt(params["bn_running_var"] + params["bn_eps"])
    scale = params["bn_weight"] * inv_std                                   # (C,)
    shift = params["bn_bias"] - params["bn_running_mean"] * scale           # (C,)
    wz = _pad_axis(_pad_axis((params["w_z"].T * scale[None, :]).astype(bf16),
                             0, cm_pad), 1, c_pad)                          # (Cmpad, Cpad)
    bz = _pad_axis((params["b_z"] * scale + shift).astype(f32)[None, :], 1, c_pad)

    const2 = lambda b, i: (0, 0)
    const3 = lambda b, qi, ki: (0, 0)

    # --- Kernel 1: theta / phi / g projections (stored bf16, channels-last) ---
    theta, phi, g = pl.pallas_call(
        _proj_kernel,
        out_shape=tuple(jax.ShapeDtypeStruct((B, HW, cm_pad), bf16) for _ in range(3)),
        grid_spec=pltpu.PrefetchScalarGridSpec(
            num_scalar_prefetch=0,
            grid=(B, HW // tile_p),
            in_specs=[
                pl.BlockSpec((1, tile_p, c_pad), lambda b, i: (b, i, 0)),   # x
                pl.BlockSpec((c_pad, cm_pad), const2),                      # w_theta
                pl.BlockSpec((1, cm_pad), const2),                          # b_theta
                pl.BlockSpec((c_pad, cm_pad), const2),                      # w_phi
                pl.BlockSpec((1, cm_pad), const2),                          # b_phi
                pl.BlockSpec((c_pad, cm_pad), const2),                      # w_g
                pl.BlockSpec((1, cm_pad), const2),                          # b_g
            ],
            out_specs=[pl.BlockSpec((1, tile_p, cm_pad), lambda b, i: (b, i, 0))
                       for _ in range(3)],
        ),
        compiler_params=pltpu.CompilerParams(
            dimension_semantics=("parallel", "parallel"),
            vmem_limit_bytes=48 * 1024 * 1024),
        interpret=interpret,
    )(x_cl, wt, bt, wp, bp, wg, bg)

    # --- Kernel 2: flash attention + W_z/BN + residual ---
    # NOTE: the constant weight/bias inputs are tiny here; at production sizes
    # single-buffer them (pipeline_mode=pl.Buffered(1)) or hoist into scratch.
    out_cl = pl.pallas_call(
        _attn_kernel,
        out_shape=jax.ShapeDtypeStruct((B, HW, c_pad), x_nchw.dtype),
        grid_spec=pltpu.PrefetchScalarGridSpec(
            num_scalar_prefetch=0,
            grid=(B, HW // tile_q, HW // tile_k),
            in_specs=[
                pl.BlockSpec((1, tile_q, cm_pad), lambda b, qi, ki: (b, qi, 0)),  # theta
                pl.BlockSpec((1, tile_k, cm_pad), lambda b, qi, ki: (b, ki, 0)),  # phi
                pl.BlockSpec((1, tile_k, cm_pad), lambda b, qi, ki: (b, ki, 0)),  # g
                pl.BlockSpec((1, tile_q, c_pad), lambda b, qi, ki: (b, qi, 0)),   # x (residual)
                pl.BlockSpec((cm_pad, c_pad), const3),                            # folded W_z
                pl.BlockSpec((1, c_pad), const3),                                 # folded bias
            ],
            out_specs=pl.BlockSpec((1, tile_q, c_pad), lambda b, qi, ki: (b, qi, 0)),
            scratch_shapes=[
                pltpu.VMEM((tile_q, 1), f32),        # m_i
                pltpu.VMEM((tile_q, 1), f32),        # l_i
                pltpu.VMEM((tile_q, cm_pad), f32),   # acc
            ],
        ),
        compiler_params=pltpu.CompilerParams(
            dimension_semantics=("parallel", "parallel", "arbitrary"),
            vmem_limit_bytes=48 * 1024 * 1024),
        interpret=interpret,
    )(theta, phi, g, x_cl, wz, bz)

    # (B, HW, Cpad) -> NCHW, dropping the padded channels.
    return jnp.transpose(out_cl[:, :, :C], (0, 2, 1)).reshape(B, C, H, W)


# ----------------------------------------------------------------------------
# Pure-JAX reference (mirrors the PyTorch forward exactly, NCHW, eval-mode BN).
# ----------------------------------------------------------------------------
def nl_block_ref(x, params):
    B, C, H, W = x.shape

    def conv1x1(xf, w, b):  # xf: (B, Cin, HW), w: (Cout, Cin)
        return jnp.einsum("oc,bcn->bon", w, xf) + b[None, :, None]

    xf = x.reshape(B, C, -1)
    g_x = jnp.transpose(conv1x1(xf, params["w_g"], params["b_g"]), (0, 2, 1))
    theta_x = jnp.transpose(conv1x1(xf, params["w_theta"], params["b_theta"]), (0, 2, 1))
    phi_x = conv1x1(xf, params["w_phi"], params["b_phi"])
    f = jnp.matmul(theta_x, phi_x)
    f_div_c = jax.nn.softmax(f, axis=-1)
    y = jnp.matmul(f_div_c, g_x)
    y = jnp.transpose(y, (0, 2, 1))
    w_y = conv1x1(y, params["w_z"], params["b_z"])
    inv_std = 1.0 / jnp.sqrt(params["bn_running_var"] + params["bn_eps"])
    w_y = (w_y - params["bn_running_mean"][None, :, None]) * \
          (params["bn_weight"] * inv_std)[None, :, None] + params["bn_bias"][None, :, None]
    return w_y.reshape(B, C, H, W) + x


# ----------------------------------------------------------------------------
# Deterministic parameter init (shapes per NLBlockND.__init__).
# ----------------------------------------------------------------------------
def init_params(key, in_channels, inter_channels):
    ks = jax.random.split(key, 7)

    def conv_init(k, cout, cin):
        bound = 1.0 / np.sqrt(cin)
        kw, kb = jax.random.split(k)
        w = jax.random.uniform(kw, (cout, cin), jnp.float32, -bound, bound)
        b = jax.random.uniform(kb, (cout,), jnp.float32, -bound, bound)
        return w, b

    w_g, b_g = conv_init(ks[0], inter_channels, in_channels)
    w_theta, b_theta = conv_init(ks[1], inter_channels, in_channels)
    w_phi, b_phi = conv_init(ks[2], inter_channels, in_channels)
    w_z, b_z = conv_init(ks[3], in_channels, inter_channels)

    # NOTE: the PyTorch module zero-inits the BN weight/bias (zero-init residual
    # branch), which would make the test trivially pass (z == x).  We use
    # non-trivial eval-mode BN parameters so the attention / W_z / BN path is
    # actually exercised numerically; the forward math is unchanged.
    bn_weight = 1.0 + 0.1 * jax.random.uniform(ks[4], (in_channels,), jnp.float32)
    bn_bias = 0.1 * jax.random.normal(ks[5], (in_channels,), jnp.float32)
    bn_running_mean = 0.1 * jax.random.normal(ks[6], (in_channels,), jnp.float32)
    bn_running_var = jnp.ones((in_channels,), jnp.float32)

    return dict(
        w_g=w_g, b_g=b_g,
        w_theta=w_theta, b_theta=b_theta,
        w_phi=w_phi, b_phi=b_phi,
        w_z=w_z, b_z=b_z,
        bn_weight=bn_weight, bn_bias=bn_bias,
        bn_running_mean=bn_running_mean, bn_running_var=bn_running_var,
        bn_eps=jnp.float32(1e-5),
    )


if __name__ == "__main__":
    key = jax.random.PRNGKey(0)
    k_x, k_p = jax.random.split(key)

    B, C, H, W = 2, 4, 16, 16          # (N, C, H, W) for dimension=2
    Cm = C // 2                        # inter_channels default = in_channels // 2

    x = jax.random.normal(k_x, (B, C, H, W), jnp.float32)
    params = init_params(k_p, C, Cm)

    z = jax.block_until_ready(jax.jit(nl_block_pallas)(x, params))
    z_ref = jax.block_until_ready(nl_block_ref(x, params))

    # bf16 MXU operands + approx reciprocal -> loosened tolerance vs f32 reference.
    np.testing.assert_allclose(np.asarray(z), np.asarray(z_ref), rtol=2e-2, atol=2e-2)

    print("KERNEL_OK")
</pallas_src>

<mosaic_0001>
module attributes {stable_mosaic.version = 11 : i64} {
  func.func @_proj_kernel(%arg0: i32, %arg1: i32, %arg2: memref<1x128x128xf32, #tpu.memory_space<vmem>>, %arg3: memref<128x128xbf16, #tpu.memory_space<vmem>>, %arg4: memref<1x128xf32, #tpu.memory_space<vmem>>, %arg5: memref<128x128xbf16, #tpu.memory_space<vmem>>, %arg6: memref<1x128xf32, #tpu.memory_space<vmem>>, %arg7: memref<128x128xbf16, #tpu.memory_space<vmem>>, %arg8: memref<1x128xf32, #tpu.memory_space<vmem>>, %arg9: memref<1x128x128xbf16, #tpu.memory_space<vmem>>, %arg10: memref<1x128x128xbf16, #tpu.memory_space<vmem>>, %arg11: memref<1x128x128xbf16, #tpu.memory_space<vmem>>) attributes {dimension_semantics = [#tpu.dimension_semantics<parallel>, #tpu.dimension_semantics<parallel>], iteration_bounds = array<i64: 2, 2>, scalar_prefetch = 0 : i64, scratch_operands = 0 : i64, tpu.core_type = #tpu.core_type<tc>, window_params = [{transform_indices = @transform_0, window_bounds = array<i64: 1, 128, 128>}, {pipeline_mode = #tpu.pipeline_mode<synchronous>, transform_indices = @transform_1, window_bounds = array<i64: 128, 128>}, {pipeline_mode = #tpu.pipeline_mode<synchronous>, transform_indices = @transform_2, window_bounds = array<i64: 1, 128>}, {pipeline_mode = #tpu.pipeline_mode<synchronous>, transform_indices = @transform_3, window_bounds = array<i64: 128, 128>}, {pipeline_mode = #tpu.pipeline_mode<synchronous>, transform_indices = @transform_4, window_bounds = array<i64: 1, 128>}, {pipeline_mode = #tpu.pipeline_mode<synchronous>, transform_indices = @transform_5, window_bounds = array<i64: 128, 128>}, {pipeline_mode = #tpu.pipeline_mode<synchronous>, transform_indices = @transform_6, window_bounds = array<i64: 1, 128>}, {transform_indices = @transform_7, window_bounds = array<i64: 1, 128, 128>}, {transform_indices = @transform_8, window_bounds = array<i64: 1, 128, 128>}, {transform_indices = @transform_9, window_bounds = array<i64: 1, 128, 128>}]} {
    %c0 = arith.constant 0 : index
    %c0_0 = arith.constant 0 : index
    %c0_1 = arith.constant 0 : index
    %0 = vector.load %arg2[%c0, %c0_0, %c0_1] : memref<1x128x128xf32, #tpu.memory_space<vmem>>, vector<1x128x128xf32>
    %1 = vector.shape_cast %0 : vector<1x128x128xf32> to vector<128x128xf32>
    %2 = arith.truncf %1 : vector<128x128xf32> to vector<128x128xbf16>
    %c0_2 = arith.constant 0 : index
    %c0_3 = arith.constant 0 : index
    %3 = vector.load %arg3[%c0_2, %c0_3] : memref<128x128xbf16, #tpu.memory_space<vmem>>, vector<128x128xbf16>
    %cst = arith.constant dense<0.000000e+00> : vector<128x128xf32>
    %4 = tpu.matmul %2, %3, %cst {dimension_numbers = #tpu.dot_dimension_numbers<[1], [0], [0], [1], [0, 0, 1, 1], [], []>} : vector<128x128xbf16>, vector<128x128xbf16>, vector<128x128xf32> -> vector<128x128xf32>
    %c0_4 = arith.constant 0 : index
    %c0_5 = arith.constant 0 : index
    %5 = vector.load %arg4[%c0_4, %c0_5] : memref<1x128xf32, #tpu.memory_space<vmem>>, vector<1x128xf32>
    %6 = vector.broadcast %5 : vector<1x128xf32> to vector<128x128xf32>
    %7 = arith.addf %4, %6 : vector<128x128xf32>
    %8 = arith.truncf %7 : vector<128x128xf32> to vector<128x128xbf16>
    %c0_6 = arith.constant 0 : index
    %c0_7 = arith.constant 0 : index
    %c0_8 = arith.constant 0 : index
    %9 = vector.load %arg9[%c0_6, %c0_7, %c0_8] : memref<1x128x128xbf16, #tpu.memory_space<vmem>>, vector<1x128x128xbf16>
    %10 = vector.shape_cast %9 : vector<1x128x128xbf16> to vector<128x128xbf16>
    %11 = vector.shape_cast %8 : vector<128x128xbf16> to vector<1x128x128xbf16>
    tpu.vector_store %arg9[%c0_6, %c0_7, %c0_8], %11 {strides = array<i32>} : memref<1x128x128xbf16, #tpu.memory_space<vmem>>, vector<1x128x128xbf16>,
    %c0_9 = arith.constant 0 : index
    %c0_10 = arith.constant 0 : index
    %12 = vector.load %arg5[%c0_9, %c0_10] : memref<128x128xbf16, #tpu.memory_space<vmem>>, vector<128x128xbf16>
    %cst_11 = arith.constant dense<0.000000e+00> : vector<128x128xf32>
    %13 = tpu.matmul %2, %12, %cst_11 {dimension_numbers = #tpu.dot_dimension_numbers<[1], [0], [0], [1], [0, 0, 1, 1], [], []>} : vector<128x128xbf16>, vector<128x128xbf16>, vector<128x128xf32> -> vector<128x128xf32>
    %c0_12 = arith.constant 0 : index
    %c0_13 = arith.constant 0 : index
    %14 = vector.load %arg6[%c0_12, %c0_13] : memref<1x128xf32, #tpu.memory_space<vmem>>, vector<1x128xf32>
    %15 = vector.broadcast %14 : vector<1x128xf32> to vector<128x128xf32>
    %16 = arith.addf %13, %15 : vector<128x128xf32>
    %17 = arith.truncf %16 : vector<128x128xf32> to vector<128x128xbf16>
    %c0_14 = arith.constant 0 : index
    %c0_15 = arith.constant 0 : index
    %c0_16 = arith.constant 0 : index
    %18 = vector.load %arg10[%c0_14, %c0_15, %c0_16] : memref<1x128x128xbf16, #tpu.memory_space<vmem>>, vector<1x128x128xbf16>
    %19 = vector.shape_cast %18 : vector<1x128x128xbf16> to vector<128x128xbf16>
    %20 = vector.shape_cast %17 : vector<128x128xbf16> to vector<1x128x128xbf16>
    tpu.vector_store %arg10[%c0_14, %c0_15, %c0_16], %20 {strides = array<i32>} : memref<1x128x128xbf16, #tpu.memory_space<vmem>>, vector<1x128x128xbf16>,
    %c0_17 = arith.constant 0 : index
    %c0_18 = arith.constant 0 : index
    %21 = vector.load %arg7[%c0_17, %c0_18] : memref<128x128xbf16, #tpu.memory_space<vmem>>, vector<128x128xbf16>
    %cst_19 = arith.constant dense<0.000000e+00> : vector<128x128xf32>
    %22 = tpu.matmul %2, %21, %cst_19 {dimension_numbers = #tpu.dot_dimension_numbers<[1], [0], [0], [1], [0, 0, 1, 1], [], []>} : vector<128x128xbf16>, vector<128x128xbf16>, vector<128x128xf32> -> vector<128x128xf32>
    %c0_20 = arith.constant 0 : index
    %c0_21 = arith.constant 0 : index
    %23 = vector.load %arg8[%c0_20, %c0_21] : memref<1x128xf32, #tpu.memory_space<vmem>>, vector<1x128xf32>
    %24 = vector.broadcast %23 : vector<1x128xf32> to vector<128x128xf32>
    %25 = arith.addf %22, %24 : vector<128x128xf32>
    %26 = arith.truncf %25 : vector<128x128xf32> to vector<128x128xbf16>
    %c0_22 = arith.constant 0 : index
    %c0_23 = arith.constant 0 : index
    %c0_24 = arith.constant 0 : index
    %27 = vector.load %arg11[%c0_22, %c0_23, %c0_24] : memref<1x128x128xbf16, #tpu.memory_space<vmem>>, vector<1x128x128xbf16>
    %28 = vector.shape_cast %27 : vector<1x128x128xbf16> to vector<128x128xbf16>
    %29 = vector.shape_cast %26 : vector<128x128xbf16> to vector<1x128x128xbf16>
    tpu.vector_store %arg11[%c0_22, %c0_23, %c0_24], %29 {strides = array<i32>} : memref<1x128x128xbf16, #tpu.memory_space<vmem>>, vector<1x128x128xbf16>,
    return
  }
  func.func @transform_0(%arg0: i32, %arg1: i32) -> (i32, i32, i32) {
    %c0_i32 = arith.constant 0 : i32
    %c0_i32_0 = arith.constant 0 : i32
    return %arg0, %arg1, %c0_i32 : i32, i32, i32
  }
  func.func @transform_1(%arg0: i32, %arg1: i32) -> (i32, i32) {
    %c0_i32 = arith.constant 0 : i32
    %c0_i32_0 = arith.constant 0 : i32
    %c0_i32_1 = arith.constant 0 : i32
    return %c0_i32, %c0_i32_0 : i32, i32
  }
  func.func @transform_2(%arg0: i32, %arg1: i32) -> (i32, i32) {
    %c0_i32 = arith.constant 0 : i32
    %c0_i32_0 = arith.constant 0 : i32
    %c0_i32_1 = arith.constant 0 : i32
    return %c0_i32, %c0_i32_0 : i32, i32
  }
  func.func @transform_3(%arg0: i32, %arg1: i32) -> (i32, i32) {
    %c0_i32 = arith.constant 0 : i32
    %c0_i32_0 = arith.constant 0 : i32
    %c0_i32_1 = arith.constant 0 : i32
    return %c0_i32, %c0_i32_0 : i32, i32
  }
  func.func @transform_4(%arg0: i32, %arg1: i32) -> (i32, i32) {
    %c0_i32 = arith.constant 0 : i32
    %c0_i32_0 = arith.constant 0 : i32
    %c0_i32_1 = arith.constant 0 : i32
    return %c0_i32, %c0_i32_0 : i32, i32
  }
  func.func @transform_5(%arg0: i32, %arg1: i32) -> (i32, i32) {
    %c0_i32 = arith.constant 0 : i32
    %c0_i32_0 = arith.constant 0 : i32
    %c0_i32_1 = arith.constant 0 : i32
    return %c0_i32, %c0_i32_0 : i32, i32
  }
  func.func @transform_6(%arg0: i32, %arg1: i32) -> (i32, i32) {
    %c0_i32 = arith.constant 0 : i32
    %c0_i32_0 = arith.constant 0 : i32
    %c0_i32_1 = arith.constant 0 : i32
    return %c0_i32, %c0_i32_0 : i32, i32
  }
  func.func @transform_7(%arg0: i32, %arg1: i32) -> (i32, i32, i32) {
    %c0_i32 = arith.constant 0 : i32
    %c0_i32_0 = arith.constant 0 : i32
    return %arg0, %arg1, %c0_i32 : i32, i32, i32
  }
  func.func @transform_8(%arg0: i32, %arg1: i32) -> (i32, i32, i32) {
    %c0_i32 = arith.constant 0 : i32
    %c0_i32_0 = arith.constant 0 : i32
    return %arg0, %arg1, %c0_i32 : i32, i32, i32
  }
  func.func @transform_9(%arg0: i32, %arg1: i32) -> (i32, i32, i32) {
    %c0_i32 = arith.constant 0 : i32
    %c0_i32_0 = arith.constant 0 : i32
    return %arg0, %arg1, %c0_i32 : i32, i32, i32
  }
}

module attributes {stable_mosaic.version = 11 : i64} {
  func.func @_attn_kernel(%arg0: i32, %arg1: i32, %arg2: i32, %arg3: memref<1x128x128xbf16, #tpu.memory_space<vmem>>, %arg4: memref<1x128x128xbf16, #tpu.memory_space<vmem>>, %arg5: memref<1x128x128xbf16, #tpu.memory_space<vmem>>, %arg6: memref<1x128x128xf32, #tpu.memory_space<vmem>>, %arg7: memref<128x128xbf16, #tpu.memory_space<vmem>>, %arg8: memref<1x128xf32, #tpu.memory_space<vmem>>, %arg9: memref<1x128x128xf32, #tpu.memory_space<vmem>>, %arg10: memref<128x1xf32, #tpu.memory_space<vmem>>, %arg11: memref<128x1xf32, #tpu.memory_space<vmem>>, %arg12: memref<128x128xf32, #tpu.memory_space<vmem>>) attributes {dimension_semantics = [#tpu.dimension_semantics<parallel>, #tpu.dimension_semantics<parallel>, #tpu.dimension_semantics<arbitrary>], iteration_bounds = array<i64: 2, 2, 2>, scalar_prefetch = 0 : i64, scratch_operands = 3 : i64, tpu.core_type = #tpu.core_type<tc>, window_params = [{transform_indices = @transform_0, window_bounds = array<i64: 1, 128, 128>}, {transform_indices = @transform_1, window_bounds = array<i64: 1, 128, 128>}, {transform_indices = @transform_2, window_bounds = array<i64: 1, 128, 128>}, {transform_indices = @transform_3, window_bounds = array<i64: 1, 128, 128>}, {pipeline_mode = #tpu.pipeline_mode<synchronous>, transform_indices = @transform_4, window_bounds = array<i64: 128, 128>}, {pipeline_mode = #tpu.pipeline_mode<synchronous>, transform_indices = @transform_5, window_bounds = array<i64: 1, 128>}, {transform_indices = @transform_6, window_bounds = array<i64: 1, 128, 128>}]} {
    %c0_i32 = arith.constant 0 : i32
    %0 = arith.cmpi eq, %arg2, %c0_i32 : i32
    %1 = arith.extui %0 : i1 to i32
    %c0_i32_0 = arith.constant 0 : i32
    %2 = arith.cmpi ne, %1, %c0_i32_0 : i32
    scf.if %2 {
      %cst_25 = arith.constant 0xFF800000 : f32
      %36 = vector.broadcast %cst_25 : f32 to vector<128x1xf32>
      %c0_26 = arith.constant 0 : index
      %c0_27 = arith.constant 0 : index
      %37 = vector.load %arg10[%c0_26, %c0_27] : memref<128x1xf32, #tpu.memory_space<vmem>>, vector<128x1xf32>
      tpu.vector_store %arg10[%c0_26, %c0_27], %36 {strides = array<i32>} : memref<128x1xf32, #tpu.memory_space<vmem>>, vector<128x1xf32>,
      %cst_28 = arith.constant 0.000000e+00 : f32
      %38 = vector.broadcast %cst_28 : f32 to vector<128x1xf32>
      %c0_29 = arith.constant 0 : index
      %c0_30 = arith.constant 0 : index
      %39 = vector.load %arg11[%c0_29, %c0_30] : memref<128x1xf32, #tpu.memory_space<vmem>>, vector<128x1xf32>
      tpu.vector_store %arg11[%c0_29, %c0_30], %38 {strides = array<i32>} : memref<128x1xf32, #tpu.memory_space<vmem>>, vector<128x1xf32>,
      %cst_31 = arith.constant 0.000000e+00 : f32
      %40 = vector.broadcast %cst_31 : f32 to vector<128x128xf32>
      %c0_32 = arith.constant 0 : index
      %c0_33 = arith.constant 0 : index
      %41 = vector.load %arg12[%c0_32, %c0_33] : memref<128x128xf32, #tpu.memory_space<vmem>>, vector<128x128xf32>
      tpu.vector_store %arg12[%c0_32, %c0_33], %40 {strides = array<i32>} : memref<128x128xf32, #tpu.memory_space<vmem>>, vector<128x128xf32>,
    } else {
    }
    %c0 = arith.constant 0 : index
    %c0_1 = arith.constant 0 : index
    %c0_2 = arith.constant 0 : index
    %3 = vector.load %arg3[%c0, %c0_1, %c0_2] : memref<1x128x128xbf16, #tpu.memory_space<vmem>>, vector<1x128x128xbf16>
    %4 = vector.shape_cast %3 : vector<1x128x128xbf16> to vector<128x128xbf16>
    %c0_3 = arith.constant 0 : index
    %c0_4 = arith.constant 0 : index
    %c0_5 = arith.constant 0 : index
    %5 = vector.load %arg4[%c0_3, %c0_4, %c0_5] : memref<1x128x128xbf16, #tpu.memory_space<vmem>>, vector<1x128x128xbf16>
    %6 = vector.shape_cast %5 : vector<1x128x128xbf16> to vector<128x128xbf16>
    %cst = arith.constant dense<0.000000e+00> : vector<128x128xf32>
    %7 = tpu.matmul %4, %6, %cst {dimension_numbers = #tpu.dot_dimension_numbers<[1], [1], [0], [0], [0, 0, 1, 0], [], []>} : vector<128x128xbf16>, vector<128x128xbf16>, vector<128x128xf32> -> vector<128x128xf32>
    %c0_6 = arith.constant 0 : index
    %c0_7 = arith.constant 0 : index
    %8 = vector.load %arg10[%c0_6, %c0_7] : memref<128x1xf32, #tpu.memory_space<vmem>>, vector<128x1xf32>
    %cst_8 = arith.constant dense<0xFF800000> : vector<128xf32>
    %9 = vector.multi_reduction <maximumf>, %7, %cst_8 [1] : vector<128x128xf32> to vector<128xf32>
    %10 = vector.shape_cast %9 : vector<128xf32> to vector<128x1xf32>
    %11 = arith.maximumf %8, %10 : vector<128x1xf32>
    %12 = arith.subf %8, %11 : vector<128x1xf32>
    %13 = math.exp %12 : vector<128x1xf32>
    %14 = vector.broadcast %11 : vector<128x1xf32> to vector<128x128xf32>
    %15 = arith.subf %7, %14 : vector<128x128xf32>
    %16 = math.exp %15 : vector<128x128xf32>
    %c0_9 = arith.constant 0 : index
    %c0_10 = arith.constant 0 : index
    %17 = vector.load %arg11[%c0_9, %c0_10] : memref<128x1xf32, #tpu.memory_space<vmem>>, vector<128x1xf32>
    %18 = arith.mulf %13, %17 : vector<128x1xf32>
    %cst_11 = arith.constant dense<0.000000e+00> : vector<128xf32>
    %19 = vector.multi_reduction <add>, %16, %cst_11 [1] : vector<128x128xf32> to vector<128xf32>
    %20 = vector.shape_cast %19 : vector<128xf32> to vector<128x1xf32>
    %21 = arith.addf %18, %20 : vector<128x1xf32>
    %c0_12 = arith.constant 0 : index
    %c0_13 = arith.constant 0 : index
    %22 = vector.load %arg11[%c0_12, %c0_13] : memref<128x1xf32, #tpu.memory_space<vmem>>, vector<128x1xf32>
    tpu.vector_store %arg11[%c0_12, %c0_13], %21 {strides = array<i32>} : memref<128x1xf32, #tpu.memory_space<vmem>>, vector<128x1xf32>,
    %23 = arith.truncf %16 : vector<128x128xf32> to vector<128x128xbf16>
    %c0_14 = arith.constant 0 : index
    %c0_15 = arith.constant 0 : index
    %c0_16 = arith.constant 0 : index
    %24 = vector.load %arg5[%c0_14, %c0_15, %c0_16] : memref<1x128x128xbf16, #tpu.memory_space<vmem>>, vector<1x128x128xbf16>
    %25 = vector.shape_cast %24 : vector<1x128x128xbf16> to vector<128x128xbf16>
    %cst_17 = arith.constant dense<0.000000e+00> : vector<128x128xf32>
    %26 = tpu.matmul %23, %25, %cst_17 {dimension_numbers = #tpu.dot_dimension_numbers<[1], [0], [0], [1], [0, 0, 1, 1], [], []>} : vector<128x128xbf16>, vector<128x128xbf16>, vector<128x128xf32> -> vector<128x128xf32>
    %c0_18 = arith.constant 0 : index
    %c0_19 = arith.constant 0 : index
    %27 = vector.load %arg12[%c0_18, %c0_19] : memref<128x128xf32, #tpu.memory_space<vmem>>, vector<128x128xf32>
    %28 = vector.broadcast %13 : vector<128x1xf32> to vector<128x128xf32>
    %29 = arith.mulf %28, %27 : vector<128x128xf32>
    %30 = arith.addf %29, %26 : vector<128x128xf32>
    %c0_20 = arith.constant 0 : index
    %c0_21 = arith.constant 0 : index
    %31 = vector.load %arg12[%c0_20, %c0_21] : memref<128x128xf32, #tpu.memory_space<vmem>>, vector<128x128xf32>
    tpu.vector_store %arg12[%c0_20, %c0_21], %30 {strides = array<i32>} : memref<128x128xf32, #tpu.memory_space<vmem>>, vector<128x128xf32>,
    %c0_22 = arith.constant 0 : index
    %c0_23 = arith.constant 0 : index
    %32 = vector.load %arg10[%c0_22, %c0_23] : memref<128x1xf32, #tpu.memory_space<vmem>>, vector<128x1xf32>
    tpu.vector_store %arg10[%c0_22, %c0_23], %11 {strides = array<i32>} : memref<128x1xf32, #tpu.memory_space<vmem>>, vector<128x1xf32>,
    %c1_i32 = arith.constant 1 : i32
    %33 = arith.cmpi eq, %arg2, %c1_i32 : i32
    %34 = arith.extui %33 : i1 to i32
    %c0_i32_24 = arith.constant 0 : i32
    %35 = arith.cmpi ne, %34, %c0_i32_24 : i32
    scf.if %35 {
      %c0_25 = arith.constant 0 : index
      %c0_26 = arith.constant 0 : index
      %36 = vector.load %arg11[%c0_25, %c0_26] : memref<128x1xf32, #tpu.memory_space<vmem>>, vector<128x1xf32>
      %37 = tpu.reciprocal %36 {approx = true} : vector<128x1xf32> -> vector<128x1xf32>
      %c0_27 = arith.constant 0 : index
      %c0_28 = arith.constant 0 : index
      %38 = vector.load %arg12[%c0_27, %c0_28] : memref<128x128xf32, #tpu.memory_space<vmem>>, vector<128x128xf32>
      %39 = vector.broadcast %37 : vector<128x1xf32> to vector<128x128xf32>
      %40 = arith.mulf %38, %39 : vector<128x128xf32>
      %41 = arith.truncf %40 : vector<128x128xf32> to vector<128x128xbf16>
      %c0_29 = arith.constant 0 : index
      %c0_30 = arith.constant 0 : index
      %42 = vector.load %arg7[%c0_29, %c0_30] : memref<128x128xbf16, #tpu.memory_space<vmem>>, vector<128x128xbf16>
      %cst_31 = arith.constant dense<0.000000e+00> : vector<128x128xf32>
      %43 = tpu.matmul %41, %42, %cst_31 {dimension_numbers = #tpu.dot_dimension_numbers<[1], [0], [0], [1], [0, 0, 1, 1], [], []>} : vector<128x128xbf16>, vector<128x128xbf16>, vector<128x128xf32> -> vector<128x128xf32>
      %c0_32 = arith.constant 0 : index
      %c0_33 = arith.constant 0 : index
      %44 = vector.load %arg8[%c0_32, %c0_33] : memref<1x128xf32, #tpu.memory_space<vmem>>, vector<1x128xf32>
      %45 = vector.broadcast %44 : vector<1x128xf32> to vector<128x128xf32>
      %46 = arith.addf %43, %45 : vector<128x128xf32>
      %c0_34 = arith.constant 0 : index
      %c0_35 = arith.constant 0 : index
      %c0_36 = arith.constant 0 : index
      %47 = vector.load %arg6[%c0_34, %c0_35, %c0_36] : memref<1x128x128xf32, #tpu.memory_space<vmem>>, vector<1x128x128xf32>
      %48 = vector.shape_cast %47 : vector<1x128x128xf32> to vector<128x128xf32>
      %49 = arith.addf %46, %48 : vector<128x128xf32>
      %c0_37 = arith.constant 0 : index
      %c0_38 = arith.constant 0 : index
      %c0_39 = arith.constant 0 : index
      %50 = vector.load %arg9[%c0_37, %c0_38, %c0_39] : memref<1x128x128xf32, #tpu.memory_space<vmem>>, vector<1x128x128xf32>
      %51 = vector.shape_cast %50 : vector<1x128x128xf32> to vector<128x128xf32>
      %52 = vector.shape_cast %49 : vector<128x128xf32> to vector<1x128x128xf32>
      tpu.vector_store %arg9[%c0_37, %c0_38, %c0_39], %52 {strides = array<i32>} : memref<1x128x128xf32, #tpu.memory_space<vmem>>, vector<1x128x128xf32>,
    } else {
    }
    return
  }
  func.func @transform_0(%arg0: i32, %arg1: i32, %arg2: i32) -> (i32, i32, i32) {
    %c0_i32 = arith.constant 0 : i32
    %c0_i32_0 = arith.constant 0 : i32
    return %arg0, %arg1, %c0_i32 : i32, i32, i32
  }
  func.func @transform_1(%arg0: i32, %arg1: i32, %arg2: i32) -> (i32, i32, i32) {
    %c0_i32 = arith.constant 0 : i32
    %c0_i32_0 = arith.constant 0 : i32
    return %arg0, %arg2, %c0_i32 : i32, i32, i32
  }
  func.func @transform_2(%arg0: i32, %arg1: i32, %arg2: i32) -> (i32, i32, i32) {
    %c0_i32 = arith.constant 0 : i32
    %c0_i32_0 = arith.constant 0 : i32
    return %arg0, %arg2, %c0_i32 : i32, i32, i32
  }
  func.func @transform_3(%arg0: i32, %arg1: i32, %arg2: i32) -> (i32, i32, i32) {
    %c0_i32 = arith.constant 0 : i32
    %c0_i32_0 = arith.constant 0 : i32
    return %arg0, %arg1, %c0_i32 : i32, i32, i32
  }
  func.func @transform_4(%arg0: i32, %arg1: i32, %arg2: i32) -> (i32, i32) {
    %c0_i32 = arith.constant 0 : i32
    %c0_i32_0 = arith.constant 0 : i32
    %c0_i32_1 = arith.constant 0 : i32
    return %c0_i32, %c0_i32_0 : i32, i32
  }
  func.func @transform_5(%arg0: i32, %arg1: i32, %arg2: i32) -> (i32, i32) {
    %c0_i32 = arith.constant 0 : i32
    %c0_i32_0 = arith.constant 0 : i32
    %c0_i32_1 = arith.constant 0 : i32
    return %c0_i32, %c0_i32_0 : i32, i32
  }
  func.func @transform_6(%arg0: i32, %arg1: i32, %arg2: i32) -> (i32, i32, i32) {
    %c0_i32 = arith.constant 0 : i32
    %c0_i32_0 = arith.constant 0 : i32
    return %arg0, %arg1, %c0_i32 : i32, i32, i32
  }
}

</mosaic_0001>

<llo_original>
// kernel: nl_block_pallas.2
$region0: #{nl_block_pallas.2}
  #allocation0 [shape = 'u32[]', space=smem, size = 0x4, offset = 0x4, fixed_abs, tag = 'smem constant byte address 0x4 - core index']
  #allocation1 [shape = 'u32[72,128]{1,0:T(1,128)}', space=vmem, size = 0x9000, scoped, tag = 'internal scratch']
  %s0 = inlined_call_operand.vmem [shape: f32[2,256,128], index: 0, kind: input, shape index: {}]
  %s1 = inlined_call_operand.vmem [shape: bf16[128,128], index: 1, kind: input, shape index: {}]
  %s2 = inlined_call_operand.vmem [shape: f32[1,128], index: 2, kind: input, shape index: {}]
  %s3 = inlined_call_operand.vmem [shape: bf16[128,128], index: 3, kind: input, shape index: {}]
  %s4 = inlined_call_operand.vmem [shape: f32[1,128], index: 4, kind: input, shape index: {}]
  %s5 = inlined_call_operand.vmem [shape: bf16[128,128], index: 5, kind: input, shape index: {}]
  %s6 = inlined_call_operand.vmem [shape: f32[1,128], index: 6, kind: input, shape index: {}]
  %s7 = inlined_call_operand.vmem [shape: bf16[2,256,128], index: 7, kind: output, shape index: {0}]
  %s8 = inlined_call_operand.vmem [shape: bf16[2,256,128], index: 8, kind: output, shape index: {1}]
  %s9 = inlined_call_operand.vmem [shape: bf16[2,256,128], index: 9, kind: output, shape index: {2}]
  %10 = xla_tuple %s7, %s8, %s9
  %s11 = sld [smem:[#allocation0]]
  $region77: #{nl_block_pallas.2} parent=0
    _
  %s13 = ssub.s32 1, %s11
  %s14 = scalar_select 0, %s13, %s11
  loop: start=0, step=1, limit=6
  $region2: #{nl_block_pallas.2} parent=0 // loop_pre_header
    _
  $region3: #{nl_block_pallas.2} parent=0 // loop_header
    %s16 = sphi 0, %s20
    %p17 = scmp.ge.s32.totalorder %s16, 6
    %s23 = sphi 0, %s35
    %s24 = sphi 0, %s31
    %s25 = sphi 0, %s23
    %s26 = sphi 0, %s24
    %s27 = sphi 0, %s25
    %s28 = sphi 0, %s26
    %s40 = sphi 0, %s42
    %s43 = sphi 0, %s40
    %s44 = sphi 0, %s43
    %s60 = sphi 0, %s44
    %s64 = sphi 0, %s64
    %s66 = sphi 0, %s64
    %s67 = sphi 0, %s66
    %s81 = sphi 0, %s67
    %s85 = sphi 0, %s85
    %s87 = sphi 0, %s85
    %s88 = sphi 0, %s87
    %s102 = sphi 0, %s88
    %s106 = sphi 0, %s106
    %s108 = sphi 0, %s106
    %s109 = sphi 0, %s108
    %s123 = sphi 0, %s109
    %s127 = sphi 0, %s127
    %s129 = sphi 0, %s127
    %s130 = sphi 0, %s129
    %s144 = sphi 0, %s130
    %s148 = sphi 0, %s148
    %s150 = sphi 0, %s148
    %s151 = sphi 0, %s150
    %s165 = sphi 0, %s151
    %s169 = sphi 0, %s169
    %s171 = sphi 0, %s169
    %s172 = sphi 0, %s171
    %s186 = sphi 0, %s172
    %s194 = sphi 0, %s196
    %s197 = sphi 0, %s194
    %s198 = sphi 0, %s197
    %s214 = sphi 0, %s198
    %s222 = sphi 0, %s224
    %s225 = sphi 0, %s222
    %s226 = sphi 0, %s225
    %s242 = sphi 0, %s226
    %s250 = sphi 0, %s252
    %s253 = sphi 0, %s250
    %s254 = sphi 0, %s253
    %s270 = sphi 0, %s254
  $region4: #{nl_block_pallas.2} parent=0 // loop_header_branch
    %19 = sbr.rel (%p17) target = $region8
  $region5: #{nl_block_pallas.2} parent=0 // loop_body
    %s21 = ssub.s32 %s16, 1
    %s22 = ssub.s32 %s16, 2
    %s29 = sadd.s32 1, %s24
    %p30 = scmp.ge.s32.totalorder %s29, 2
    %s31 = scalar_select %p30, 0, %s29
    %s32 = sadd.s32 1, %s23
    %s33 = scalar_select %p30, %s32, %s23
    %p34 = scmp.ge.s32.totalorder %s33, 2
    %s35 = scalar_select %p34, 0, %s33
    %s36 = ssub.s32 %s23, %s35
    %s37 = ssub.s32 %s24, %s31
    %s38 = sor.u32 %s36, %s37
    %p39 = scmp.eq.s32.totalorder %s38, 0
    %s41 = sadd.s32 %s40, 1
    %s42 = scalar_select %p39, %s40, %s41
    %p45 = pneg %p39
    %p46 = scmp.eq.s32.totalorder %s16, 3
    %p47 = por %p45, %p46
    %p48 = scmp.ne.s32.totalorder %s40, %s43
    %p49 = scmp.eq.s32.totalorder %s16, 0
    %p50 = por %p48, %p49
    %p51 = scmp.ne.s32.totalorder %s40, %s43
    %p52 = scmp.eq.s32.totalorder %s21, 3
    %p53 = por %p51, %p52
    %p54 = scmp.ne.s32.totalorder %s43, %s44
    %p55 = scmp.eq.s32.totalorder %s21, 0
    %p56 = por %p54, %p55
    %p57 = scmp.ne.s32.totalorder %s43, %s44
    %p58 = scmp.eq.s32.totalorder %s22, 3
    %p59 = por %p57, %p58
    %p61 = scmp.ne.s32.totalorder %s44, %s60
    %p62 = scmp.eq.s32.totalorder %s22, 0
    %p63 = por %p61, %p62
    %s65 = sadd.s32 %s64, 1
    %p68 = scmp.eq.s32.totalorder %s16, 3
    %p69 = scmp.ne.s32.totalorder %s64, %s66
    %p70 = scmp.eq.s32.totalorder %s16, 0
    %p71 = por %p69, %p70
    %p72 = scmp.ne.s32.totalorder %s64, %s66
    %p73 = scmp.eq.s32.totalorder %s21, 3
    %p74 = por %p72, %p73
    %p75 = scmp.ne.s32.totalorder %s66, %s67
    %p76 = scmp.eq.s32.totalorder %s21, 0
    %p77 = por %p75, %p76
    %p78 = scmp.ne.s32.totalorder %s66, %s67
    %p79 = scmp.eq.s32.totalorder %s22, 3
    %p80 = por %p78, %p79
    %p82 = scmp.ne.s32.totalorder %s67, %s81
    %p83 = scmp.eq.s32.totalorder %s22, 0
    %p84 = por %p82, %p83
    %s86 = sadd.s32 %s85, 1
    %p89 = scmp.eq.s32.totalorder %s16, 3
    %p90 = scmp.ne.s32.totalorder %s85, %s87
    %p91 = scmp.eq.s32.totalorder %s16, 0
    %p92 = por %p90, %p91
    %p93 = scmp.ne.s32.totalorder %s85, %s87
    %p94 = scmp.eq.s32.totalorder %s21, 3
    %p95 = por %p93, %p94
    %p96 = scmp.ne.s32.totalorder %s87, %s88
    %p97 = scmp.eq.s32.totalorder %s21, 0
    %p98 = por %p96, %p97
    %p99 = scmp.ne.s32.totalorder %s87, %s88
    %p100 = scmp.eq.s32.totalorder %s22, 3
    %p101 = por %p99, %p100
    %p103 = scmp.ne.s32.totalorder %s88, %s102
    %p104 = scmp.eq.s32.totalorder %s22, 0
    %p105 = por %p103, %p104
    %s107 = sadd.s32 %s106, 1
    %p110 = scmp.eq.s32.totalorder %s16, 3
    %p111 = scmp.ne.s32.totalorder %s106, %s108
    %p112 = scmp.eq.s32.totalorder %s16, 0
    %p113 = por %p111, %p112
    %p114 = scmp.ne.s32.totalorder %s106, %s108
    %p115 = scmp.eq.s32.totalorder %s21, 3
    %p116 = por %p114, %p115
    %p117 = scmp.ne.s32.totalorder %s108, %s109
    %p118 = scmp.eq.s32.totalorder %s21, 0
    %p119 = por %p117, %p118
    %p120 = scmp.ne.s32.totalorder %s108, %s109
    %p121 = scmp.eq.s32.totalorder %s22, 3
    %p122 = por %p120, %p121
    %p124 = scmp.ne.s32.totalorder %s109, %s123
    %p125 = scmp.eq.s32.totalorder %s22, 0
    %p126 = por %p124, %p125
    %s128 = sadd.s32 %s127, 1
    %p131 = scmp.eq.s32.totalorder %s16, 3
    %p132 = scmp.ne.s32.totalorder %s127, %s129
    %p133 = scmp.eq.s32.totalorder %s16, 0
    %p134 = por %p132, %p133
    %p135 = scmp.ne.s32.totalorder %s127, %s129
    %p136 = scmp.eq.s32.totalorder %s21, 3
    %p137 = por %p135, %p136
    %p138 = scmp.ne.s32.totalorder %s129, %s130
    %p139 = scmp.eq.s32.totalorder %s21, 0
    %p140 = por %p138, %p139
    %p141 = scmp.ne.s32.totalorder %s129, %s130
    %p142 = scmp.eq.s32.totalorder %s22, 3
    %p143 = por %p141, %p142
    %p145 = scmp.ne.s32.totalorder %s130, %s144
    %p146 = scmp.eq.s32.totalorder %s22, 0
    %p147 = por %p145, %p146
    %s149 = sadd.s32 %s148, 1
    %p152 = scmp.eq.s32.totalorder %s16, 3
    %p153 = scmp.ne.s32.totalorder %s148, %s150
    %p154 = scmp.eq.s32.totalorder %s16, 0
    %p155 = por %p153, %p154
    %p156 = scmp.ne.s32.totalorder %s148, %s150
    %p157 = scmp.eq.s32.totalorder %s21, 3
    %p158 = por %p156, %p157
    %p159 = scmp.ne.s32.totalorder %s150, %s151
    %p160 = scmp.eq.s32.totalorder %s21, 0
    %p161 = por %p159, %p160
    %p162 = scmp.ne.s32.totalorder %s150, %s151
    %p163 = scmp.eq.s32.totalorder %s22, 3
    %p164 = por %p162, %p163
    %p166 = scmp.ne.s32.totalorder %s151, %s165
    %p167 = scmp.eq.s32.totalorder %s22, 0
    %p168 = por %p166, %p167
    %s170 = sadd.s32 %s169, 1
    %p173 = scmp.eq.s32.totalorder %s16, 3
    %p174 = scmp.ne.s32.totalorder %s169, %s171
    %p175 = scmp.eq.s32.totalorder %s16, 0
    %p176 = por %p174, %p175
    %p177 = scmp.ne.s32.totalorder %s169, %s171
    %p178 = scmp.eq.s32.totalorder %s21, 3
    %p179 = por %p177, %p178
    %p180 = scmp.ne.s32.totalorder %s171, %s172
    %p181 = scmp.eq.s32.totalorder %s21, 0
    %p182 = por %p180, %p181
    %p183 = scmp.ne.s32.totalorder %s171, %s172
    %p184 = scmp.eq.s32.totalorder %s22, 3
    %p185 = por %p183, %p184
    %p187 = scmp.ne.s32.totalorder %s172, %s186
    %p188 = scmp.eq.s32.totalorder %s22, 0
    %p189 = por %p187, %p188
    %s190 = ssub.s32 %s23, %s35
    %s191 = ssub.s32 %s24, %s31
    %s192 = sor.u32 %s190, %s191
    %p193 = scmp.eq.s32.totalorder %s192, 0
    %s195 = sadd.s32 %s194, 1
    %s196 = scalar_select %p193, %s194, %s195
    %p199 = pneg %p193
    %p200 = scmp.eq.s32.totalorder %s16, 3
    %p201 = por %p199, %p200
    %p202 = scmp.ne.s32.totalorder %s194, %s197
    %p203 = scmp.eq.s32.totalorder %s16, 0
    %p204 = por %p202, %p203
    %p205 = scmp.ne.s32.totalorder %s194, %s197
    %p206 = scmp.eq.s32.totalorder %s21, 3
    %p207 = por %p205, %p206
    %p208 = scmp.ne.s32.totalorder %s197, %s198
    %p209 = scmp.eq.s32.totalorder %s21, 0
    %p210 = por %p208, %p209
    %p211 = scmp.ne.s32.totalorder %s197, %s198
    %p212 = scmp.eq.s32.totalorder %s22, 3
    %p213 = por %p211, %p212
    %p215 = scmp.ne.s32.totalorder %s198, %s214
    %p216 = scmp.eq.s32.totalorder %s22, 0
    %p217 = por %p215, %p216
    %s218 = ssub.s32 %s23, %s35
    %s219 = ssub.s32 %s24, %s31
    %s220 = sor.u32 %s218, %s219
    %p221 = scmp.eq.s32.totalorder %s220, 0
    %s223 = sadd.s32 %s222, 1
    %s224 = scalar_select %p221, %s222, %s223
    %p227 = pneg %p221
    %p228 = scmp.eq.s32.totalorder %s16, 3
    %p229 = por %p227, %p228
    %p230 = scmp.ne.s32.totalorder %s222, %s225
    %p231 = scmp.eq.s32.totalorder %s16, 0
    %p232 = por %p230, %p231
    %p233 = scmp.ne.s32.totalorder %s222, %s225
    %p234 = scmp.eq.s32.totalorder %s21, 3
    %p235 = por %p233, %p234
    %p236 = scmp.ne.s32.totalorder %s225, %s226
    %p237 = scmp.eq.s32.totalorder %s21, 0
    %p238 = por %p236, %p237
    %p239 = scmp.ne.s32.totalorder %s225, %s226
    %p240 = scmp.eq.s32.totalorder %s22, 3
    %p241 = por %p239, %p240
    %p243 = scmp.ne.s32.totalorder %s226, %s242
    %p244 = scmp.eq.s32.totalorder %s22, 0
    %p245 = por %p243, %p244
    %s246 = ssub.s32 %s23, %s35
    %s247 = ssub.s32 %s24, %s31
    %s248 = sor.u32 %s246, %s247
    %p249 = scmp.eq.s32.totalorder %s248, 0
    %s251 = sadd.s32 %s250, 1
    %s252 = scalar_select %p249, %s250, %s251
    %p255 = pneg %p249
    %p256 = scmp.eq.s32.totalorder %s16, 3
    %p257 = por %p255, %p256
    %p258 = scmp.ne.s32.totalorder %s250, %s253
    %p259 = scmp.eq.s32.totalorder %s16, 0
    %p260 = por %p258, %p259
    %p261 = scmp.ne.s32.totalorder %s250, %s253
    %p262 = scmp.eq.s32.totalorder %s21, 3
    %p263 = por %p261, %p262
    %p264 = scmp.ne.s32.totalorder %s253, %s254
    %p265 = scmp.eq.s32.totalorder %s21, 0
    %p266 = por %p264, %p265
    %p267 = scmp.ne.s32.totalorder %s253, %s254
    %p268 = scmp.eq.s32.totalorder %s22, 3
    %p269 = por %p267, %p268
    %p271 = scmp.ne.s32.totalorder %s254, %s270
    %p272 = scmp.eq.s32.totalorder %s22, 0
    %p273 = por %p271, %p272
    %p274 = scmp.le.s32.totalorder 1, %s16
    %p275 = scmp.lt.s32.totalorder %s16, 5
    %p276 = pnand %p274, %p275
    %p277 = pneg %p276
    // Predicated region
    $region9: #{nl_block_pallas.2} parent=5 // pred_check
      _
    $region10: #{nl_block_pallas.2} parent=5 // pred_check_branch
      %279 = sbr.rel (%p276) target = $region12
    $region11: #{nl_block_pallas.2} parent=5 // pred_region
      %s280 = ssub.s32 %s16, 1
      // Predicated region
      $region13: #{nl_block_pallas.2} parent=11 // pred_check
        %p281 = pneg %p77
      $region14: #{nl_block_pallas.2} parent=11 // pred_check_branch
        %283 = sbr.rel (%p281) target = $region16
      $region15: #{nl_block_pallas.2} parent=11 // pred_region
        _
      $region16: #{nl_block_pallas.2} parent=11 // pred_fallthru
        _
      // Predicated region
      $region17: #{nl_block_pallas.2} parent=11 // pred_check
        %p284 = pneg %p98
      $region18: #{nl_block_pallas.2} parent=11 // pred_check_branch
        %286 = sbr.rel (%p284) target = $region20
      $region19: #{nl_block_pallas.2} parent=11 // pred_region
        _
      $region20: #{nl_block_pallas.2} parent=11 // pred_fallthru
        _
      // Predicated region
      $region21: #{nl_block_pallas.2} parent=11 // pred_check
        %p287 = pneg %p119
      $region22: #{nl_block_pallas.2} parent=11 // pred_check_branch
        %289 = sbr.rel (%p287) target = $region24
      $region23: #{nl_block_pallas.2} parent=11 // pred_region
        _
      $region24: #{nl_block_pallas.2} parent=11 // pred_fallthru
        _
      // Predicated region
      $region25: #{nl_block_pallas.2} parent=11 // pred_check
        %p290 = pneg %p140
      $region26: #{nl_block_pallas.2} parent=11 // pred_check_branch
        %292 = sbr.rel (%p290) target = $region28
      $region27: #{nl_block_pallas.2} parent=11 // pred_region
        _
      $region28: #{nl_block_pallas.2} parent=11 // pred_fallthru
        _
      // Predicated region
      $region29: #{nl_block_pallas.2} parent=11 // pred_check
        %p293 = pneg %p161
      $region30: #{nl_block_pallas.2} parent=11 // pred_check_branch
        %295 = sbr.rel (%p293) target = $region32
      $region31: #{nl_block_pallas.2} parent=11 // pred_region
        _
      $region32: #{nl_block_pallas.2} parent=11 // pred_fallthru
        _
      // Predicated region
      $region33: #{nl_block_pallas.2} parent=11 // pred_check
        %p296 = pneg %p182
      $region34: #{nl_block_pallas.2} parent=11 // pred_check_branch
        %298 = sbr.rel (%p296) target = $region36
      $region35: #{nl_block_pallas.2} parent=11 // pred_region
        _
      $region36: #{nl_block_pallas.2} parent=11 // pred_fallthru
        _
    $region12: #{nl_block_pallas.2} parent=5 // pred_fallthru
      _
    %p299 = scmp.lt.s32.totalorder %s16, 4
    // Predicated region
    $region37: #{nl_block_pallas.2} parent=5 // pred_check
      %p300 = pneg %p299
    $region38: #{nl_block_pallas.2} parent=5 // pred_check_branch
      %302 = sbr.rel (%p300) target = $region40
    $region39: #{nl_block_pallas.2} parent=5 // pred_region
      // Predicated region
      $region41: #{nl_block_pallas.2} parent=39 // pred_check
        %p303 = pneg %p50
      $region42: #{nl_block_pallas.2} parent=39 // pred_check_branch
        %305 = sbr.rel (%p303) target = $region44
      $region43: #{nl_block_pallas.2} parent=39 // pred_region
        %s306 = smul.u32 16, %s24
        %p307 = scmp.lt.s32.totalorder %s23, 1
        %s308 = scalar_select %p307, %s23, 1
        %p309 = scmp.lt.s32.totalorder %s306, 31
        %s310 = scalar_select %p309, %s306, 31
        %s311 = smul.addr %s308, 32
        %s312 = sadd.s32 %s310, %s311
        %s313 = smul.addr %s312, 8
        %s314 = scalar_lea.vmem %s0, %s313
        %s315 = smul.u32 16, %s24
      $region44: #{nl_block_pallas.2} parent=39 // pred_fallthru
        _
    $region40: #{nl_block_pallas.2} parent=5 // pred_fallthru
      _
    %p316 = scmp.le.s32.totalorder 1, %s16
    %p317 = scmp.lt.s32.totalorder %s16, 5
    %p318 = pnand %p316, %p317
    %p319 = pneg %p318
    // Predicated region
    $region45: #{nl_block_pallas.2} parent=5 // pred_check
      _
    $region46: #{nl_block_pallas.2} parent=5 // pred_check_branch
      %321 = sbr.rel (%p318) target = $region48
    $region47: #{nl_block_pallas.2} parent=5 // pred_region
      %s322 = ssub.s32 %s16, 1
      %s323 = smul.u32 16, %s26
      %p324 = scmp.lt.s32.totalorder %s25, 1
      %s325 = scalar_select %p324, %s25, 1
      %p326 = scmp.lt.s32.totalorder %s323, 31
      %s327 = scalar_select %p326, %s323, 31
      %s328 = smul.addr %s325, 32
      %s329 = sadd.s32 %s327, %s328
      %s330 = smul.addr %s329, 8
      %s331 = scalar_lea.vmem %s0, %s330
      %p332 = pneg %p56
      %p333 = pneg %p53
      %p334 = pneg %p77
      %p335 = pneg %p74
      %p336 = pneg %p98
      %p337 = pneg %p95
      %p338 = pneg %p119
      %p339 = pneg %p116
      %p340 = pneg %p140
      %p341 = pneg %p137
      %p342 = pneg %p161
      %p343 = pneg %p158
      %p344 = pneg %p182
      %p345 = pneg %p179
      %p346 = pneg %p210
      %p347 = pneg %p207
      %s348 = smul.u32 16, %s26
      %p349 = scmp.lt.s32.totalorder %s25, 1
      %s350 = scalar_select %p349, %s25, 1
      %p351 = scmp.lt.s32.totalorder %s348, 31
      %s352 = scalar_select %p351, %s348, 31
      %s353 = smul.addr %s350, 32
      %s354 = sadd.s32 %s352, %s353
      %s355 = smul.addr %s354, 4
      %s356 = scalar_lea.vmem %s7, %s355
      %p357 = pneg %p238
      %p358 = pneg %p235
      %s359 = smul.u32 16, %s26
      %p360 = scmp.lt.s32.totalorder %s25, 1
      %s361 = scalar_select %p360, %s25, 1
      %p362 = scmp.lt.s32.totalorder %s359, 31
      %s363 = scalar_select %p362, %s359, 31
      %s364 = smul.addr %s361, 32
      %s365 = sadd.s32 %s363, %s364
      %s366 = smul.addr %s365, 4
      %s367 = scalar_lea.vmem %s8, %s366
      %p368 = pneg %p266
      %p369 = pneg %p263
      %s370 = smul.u32 16, %s26
      %p371 = scmp.lt.s32.totalorder %s25, 1
      %s372 = scalar_select %p371, %s25, 1
      %p373 = scmp.lt.s32.totalorder %s370, 31
      %s374 = scalar_select %p373, %s370, 31
      %s375 = smul.addr %s372, 32
      %s376 = sadd.s32 %s374, %s375
      %s377 = smul.addr %s376, 4
      %s378 = scalar_lea.vmem %s9, %s377
      %s379 = smul.u32 16, %s26
      %p380 = scmp.lt.s32.totalorder %s25, 1
      %s381 = scalar_select %p380, %s25, 1
      %p382 = scmp.lt.s32.totalorder %s379, 31
      %s383 = scalar_select %p382, %s379, 31
      %s384 = smul.addr %s381, 32
      %s385 = sadd.s32 %s383, %s384
      %s386 = smul.addr %s385, 8
      %s387 = scalar_lea.vmem %s0, %s386
      %s388 = smul.u32 16, %s26
      %s389 = smul.u32 16, %s26
      %p390 = scmp.lt.s32.totalorder %s25, 1
      %s391 = scalar_select %p390, %s25, 1
      %p392 = scmp.lt.s32.totalorder %s389, 31
      %s393 = scalar_select %p392, %s389, 31
      %s394 = smul.addr %s391, 32
      %s395 = sadd.s32 %s393, %s394
      %s396 = smul.addr %s395, 4
      %s397 = scalar_lea.vmem %s7, %s396
      %s398 = smul.u32 16, %s26
      %s399 = smul.u32 16, %s26
      %p400 = scmp.lt.s32.totalorder %s25, 1
      %s401 = scalar_select %p400, %s25, 1
      %p402 = scmp.lt.s32.totalorder %s399, 31
      %s403 = scalar_select %p402, %s399, 31
      %s404 = smul.addr %s401, 32
      %s405 = sadd.s32 %s403, %s404
      %s406 = smul.addr %s405, 4
      %s407 = scalar_lea.vmem %s8, %s406
      %s408 = smul.u32 16, %s26
      %s409 = smul.u32 16, %s26
      %p410 = scmp.lt.s32.totalorder %s25, 1
      %s411 = scalar_select %p410, %s25, 1
      %p412 = scmp.lt.s32.totalorder %s409, 31
      %s413 = scalar_select %p412, %s409, 31
      %s414 = smul.addr %s411, 32
      %s415 = sadd.s32 %s413, %s414
      %s416 = smul.addr %s415, 4
      %s417 = scalar_lea.vmem %s9, %s416
      %s418 = smul.u32 16, %s26
      %v419 = vld [vmem:[%s387] sm:$0xff]
      %v420 = vld [vmem:[%s387 + $0x8] sm:$0xff]
      %v421 = vld [vmem:[%s387 + $0x10] sm:$0xff]
      %v422 = vld [vmem:[%s387 + $0x18] sm:$0xff]
      %v423 = vld [vmem:[%s387 + $0x20] sm:$0xff]
      %v424 = vld [vmem:[%s387 + $0x28] sm:$0xff]
      %v425 = vld [vmem:[%s387 + $0x30] sm:$0xff]
      %v426 = vld [vmem:[%s387 + $0x38] sm:$0xff]
      %v427 = vld [vmem:[%s387 + $0x40] sm:$0xff]
      %v428 = vld [vmem:[%s387 + $0x48] sm:$0xff]
      %v429 = vld [vmem:[%s387 + $0x50] sm:$0xff]
      %v430 = vld [vmem:[%s387 + $0x58] sm:$0xff]
      %v431 = vld [vmem:[%s387 + $0x60] sm:$0xff]
      %v432 = vld [vmem:[%s387 + $0x68] sm:$0xff]
      %v433 = vld [vmem:[%s387 + $0x70] sm:$0xff]
      %v434 = vld [vmem:[%s387 + $0x78] sm:$0xff]
      %v435 = vpack.c.bf16 %v420, %v419
      %v436 = vpack.c.bf16 %v422, %v421
      %v437 = vpack.c.bf16 %v424, %v423
      %v438 = vpack.c.bf16 %v426, %v425
      %v439 = vpack.c.bf16 %v428, %v427
      %v440 = vpack.c.bf16 %v430, %v429
      %v441 = vpack.c.bf16 %v432, %v431
      %v442 = vpack.c.bf16 %v434, %v433
      %v443 = vld [vmem:[%s1] sm:$0xf]
      %v444 = vld [vmem:[%s1 + $0x4] sm:$0xf]
      %v445 = vld [vmem:[%s1 + $0x8] sm:$0xf]
      %v446 = vld [vmem:[%s1 + $0xc] sm:$0xf]
      %v447 = vld [vmem:[%s1 + $0x10] sm:$0xf]
      %v448 = vld [vmem:[%s1 + $0x14] sm:$0xf]
      %v449 = vld [vmem:[%s1 + $0x18] sm:$0xf]
      %v450 = vld [vmem:[%s1 + $0x1c] sm:$0xf]
      %v451 = vld [vmem:[%s1 + $0x20] sm:$0xf]
      %v452 = vld [vmem:[%s1 + $0x24] sm:$0xf]
      %v453 = vld [vmem:[%s1 + $0x28] sm:$0xf]
      %v454 = vld [vmem:[%s1 + $0x2c] sm:$0xf]
      %v455 = vld [vmem:[%s1 + $0x30] sm:$0xf]
      %v456 = vld [vmem:[%s1 + $0x34] sm:$0xf]
      %v457 = vld [vmem:[%s1 + $0x38] sm:$0xf]
      %v458 = vld [vmem:[%s1 + $0x3c] sm:$0xf]
      %v459 = vld [vmem:[%s2] sm:$0x1]
      %v461 = vperm.slane %v459, 0
      %v479 = vunpack.c.l.b16 %v443
      %v480 = vunpack.c.l.b16 %v444
      %v481 = vunpack.c.l.b16 %v445
      %v482 = vunpack.c.l.b16 %v446
      %v483 = vunpack.c.l.b16 %v447
      %v484 = vunpack.c.l.b16 %v448
      %v485 = vunpack.c.l.b16 %v449
      %v486 = vunpack.c.l.b16 %v450
      %v487 = vunpack.c.l.b16 %v451
      %v488 = vunpack.c.l.b16 %v452
      %v489 = vunpack.c.l.b16 %v453
      %v490 = vunpack.c.l.b16 %v454
      %v491 = vunpack.c.l.b16 %v455
      %v492 = vunpack.c.l.b16 %v456
      %v493 = vunpack.c.l.b16 %v457
      %v494 = vunpack.c.l.b16 %v458
      %v495 = vpack.c.b16 %v480, %v479
      %v496 = vpack.c.b16 %v482, %v481
      %v497 = vpack.c.b16 %v484, %v483
      %v498 = vpack.c.b16 %v486, %v485
      %v499 = vpack.c.b16 %v488, %v487
      %v500 = vpack.c.b16 %v490, %v489
      %v501 = vpack.c.b16 %v492, %v491
      %v502 = vpack.c.b16 %v494, %v493
      %511 = vmatpush.bf16.msra.mxu0 %v502
      %512 = vmatpush.bf16.msra.mxu0 %v501
      %513 = vmatpush.bf16.msra.mxu0 %v500
      %514 = vmatpush.bf16.msra.mxu0 %v499
      %515 = vmatpush.bf16.msra.mxu0 %v498
      %516 = vmatpush.bf16.msra.mxu0 %v497
      %517 = vmatpush.bf16.msra.mxu0 %v496
      %518 = vmatpush.bf16.msra.mxu0 %v495
      %519 = vmatmul.bf16.gmra.mxu0 %v435
      %v520 = vpop.f32.mrf.mxu0
      %v521 = vadd.f32 %v461, %v520
      %v522 = vpop.f32.mrf.mxu0
      %v523 = vadd.f32 %v461, %v522
      %524 = vmatmul.bf16.gmra.mxu0 %v436
      %v525 = vpop.f32.mrf.mxu0
      %v526 = vadd.f32 %v461, %v525
      %v527 = vpop.f32.mrf.mxu0
      %v528 = vadd.f32 %v461, %v527
      %529 = vmatmul.bf16.gmra.mxu0 %v437
      %v530 = vpop.f32.mrf.mxu0
      %v531 = vadd.f32 %v461, %v530
      %v532 = vpop.f32.mrf.mxu0
      %v533 = vadd.f32 %v461, %v532
      %534 = vmatmul.bf16.gmra.mxu0 %v438
      %v535 = vpop.f32.mrf.mxu0
      %v536 = vadd.f32 %v461, %v535
      %v537 = vpop.f32.mrf.mxu0
      %v538 = vadd.f32 %v461, %v537
      %539 = vmatmul.bf16.gmra.mxu0 %v439
      %v540 = vpop.f32.mrf.mxu0
      %v541 = vadd.f32 %v461, %v540
      %v542 = vpop.f32.mrf.mxu0
      %v543 = vadd.f32 %v461, %v542
      %544 = vmatmul.bf16.gmra.mxu0 %v440
      %v545 = vpop.f32.mrf.mxu0
      %v546 = vadd.f32 %v461, %v545
      %v547 = vpop.f32.mrf.mxu0
      %v548 = vadd.f32 %v461, %v547
      %549 = vmatmul.bf16.gmra.mxu0 %v441
      %v550 = vpop.f32.mrf.mxu0
      %v551 = vadd.f32 %v461, %v550
      %v552 = vpop.f32.mrf.mxu0
      %v553 = vadd.f32 %v461, %v552
      %554 = vmatmul.bf16.gmra.mxu0 %v442
      %v555 = vpop.f32.mrf.mxu0
      %v556 = vadd.f32 %v461, %v555
      %v557 = vpop.f32.mrf.mxu0
      %v558 = vadd.f32 %v461, %v557
      %559 = vdwg.mxu0
      %v560 = vpack.c.bf16 %v521, %v521
      %v561 = vpack.c.bf16 %v523, %v523
      %v562 = vpack.c.bf16 %v526, %v526
      %v563 = vpack.c.bf16 %v528, %v528
      %v564 = vpack.c.bf16 %v531, %v531
      %v565 = vpack.c.bf16 %v533, %v533
      %v566 = vpack.c.bf16 %v536, %v536
      %v567 = vpack.c.bf16 %v538, %v538
      %v568 = vpack.c.bf16 %v541, %v541
      %v569 = vpack.c.bf16 %v543, %v543
      %v570 = vpack.c.bf16 %v546, %v546
      %v571 = vpack.c.bf16 %v548, %v548
      %v572 = vpack.c.bf16 %v551, %v551
      %v573 = vpack.c.bf16 %v553, %v553
      %v574 = vpack.c.bf16 %v556, %v556
      %v575 = vpack.c.bf16 %v558, %v558
      %576 = vst [vmem:[%s397] sm:$0xf] %v560
      %577 = vst [vmem:[%s397 + $0x4] sm:$0xf] %v561
      %578 = vst [vmem:[%s397 + $0x8] sm:$0xf] %v562
      %579 = vst [vmem:[%s397 + $0xc] sm:$0xf] %v563
      %580 = vst [vmem:[%s397 + $0x10] sm:$0xf] %v564
      %581 = vst [vmem:[%s397 + $0x14] sm:$0xf] %v565
      %582 = vst [vmem:[%s397 + $0x18] sm:$0xf] %v566
      %583 = vst [vmem:[%s397 + $0x1c] sm:$0xf] %v567
      %584 = vst [vmem:[%s397 + $0x20] sm:$0xf] %v568
      %585 = vst [vmem:[%s397 + $0x24] sm:$0xf] %v569
      %586 = vst [vmem:[%s397 + $0x28] sm:$0xf] %v570
      %587 = vst [vmem:[%s397 + $0x2c] sm:$0xf] %v571
      %588 = vst [vmem:[%s397 + $0x30] sm:$0xf] %v572
      %589 = vst [vmem:[%s397 + $0x34] sm:$0xf] %v573
      %590 = vst [vmem:[%s397 + $0x38] sm:$0xf] %v574
      %591 = vst [vmem:[%s397 + $0x3c] sm:$0xf] %v575
      %v592 = vld [vmem:[%s3] sm:$0xf]
      %v593 = vld [vmem:[%s3 + $0x4] sm:$0xf]
      %v594 = vld [vmem:[%s3 + $0x8] sm:$0xf]
      %v595 = vld [vmem:[%s3 + $0xc] sm:$0xf]
      %v596 = vld [vmem:[%s3 + $0x10] sm:$0xf]
      %v597 = vld [vmem:[%s3 + $0x14] sm:$0xf]
      %v598 = vld [vmem:[%s3 + $0x18] sm:$0xf]
      %v599 = vld [vmem:[%s3 + $0x1c] sm:$0xf]
      %v600 = vld [vmem:[%s3 + $0x20] sm:$0xf]
      %v601 = vld [vmem:[%s3 + $0x24] sm:$0xf]
      %v602 = vld [vmem:[%s3 + $0x28] sm:$0xf]
      %v603 = vld [vmem:[%s3 + $0x2c] sm:$0xf]
      %v604 = vld [vmem:[%s3 + $0x30] sm:$0xf]
      %v605 = vld [vmem:[%s3 + $0x34] sm:$0xf]
      %v606 = vld [vmem:[%s3 + $0x38] sm:$0xf]
      %v607 = vld [vmem:[%s3 + $0x3c] sm:$0xf]
      %v608 = vld [vmem:[%s4] sm:$0x1]
      %v610 = vperm.slane %v608, 0
      %v628 = vunpack.c.l.b16 %v592
      %v629 = vunpack.c.l.b16 %v593
      %v630 = vunpack.c.l.b16 %v594
      %v631 = vunpack.c.l.b16 %v595
      %v632 = vunpack.c.l.b16 %v596
      %v633 = vunpack.c.l.b16 %v597
      %v634 = vunpack.c.l.b16 %v598
      %v635 = vunpack.c.l.b16 %v599
      %v636 = vunpack.c.l.b16 %v600
      %v637 = vunpack.c.l.b16 %v601
      %v638 = vunpack.c.l.b16 %v602
      %v639 = vunpack.c.l.b16 %v603
      %v640 = vunpack.c.l.b16 %v604
      %v641 = vunpack.c.l.b16 %v605
      %v642 = vunpack.c.l.b16 %v606
      %v643 = vunpack.c.l.b16 %v607
      %v644 = vpack.c.b16 %v629, %v628
      %v645 = vpack.c.b16 %v631, %v630
      %v646 = vpack.c.b16 %v633, %v632
      %v647 = vpack.c.b16 %v635, %v634
      %v648 = vpack.c.b16 %v637, %v636
      %v649 = vpack.c.b16 %v639, %v638
      %v650 = vpack.c.b16 %v641, %v640
      %v651 = vpack.c.b16 %v643, %v642
      %660 = vmatpush.bf16.msra.mxu0 %v651
      %661 = vmatpush.bf16.msra.mxu0 %v650
      %662 = vmatpush.bf16.msra.mxu0 %v649
      %663 = vmatpush.bf16.msra.mxu0 %v648
      %664 = vmatpush.bf16.msra.mxu0 %v647
      %665 = vmatpush.bf16.msra.mxu0 %v646
      %666 = vmatpush.bf16.msra.mxu0 %v645
      %667 = vmatpush.bf16.msra.mxu0 %v644
      %668 = vmatmul.bf16.gmra.mxu0 %v435
      %v669 = vpop.f32.mrf.mxu0
      %v670 = vadd.f32 %v610, %v669
      %v671 = vpop.f32.mrf.mxu0
      %v672 = vadd.f32 %v610, %v671
      %673 = vmatmul.bf16.gmra.mxu0 %v436
      %v674 = vpop.f32.mrf.mxu0
      %v675 = vadd.f32 %v610, %v674
      %v676 = vpop.f32.mrf.mxu0
      %v677 = vadd.f32 %v610, %v676
      %678 = vmatmul.bf16.gmra.mxu0 %v437
      %v679 = vpop.f32.mrf.mxu0
      %v680 = vadd.f32 %v610, %v679
      %v681 = vpop.f32.mrf.mxu0
      %v682 = vadd.f32 %v610, %v681
      %683 = vmatmul.bf16.gmra.mxu0 %v438
      %v684 = vpop.f32.mrf.mxu0
      %v685 = vadd.f32 %v610, %v684
      %v686 = vpop.f32.mrf.mxu0
      %v687 = vadd.f32 %v610, %v686
      %688 = vmatmul.bf16.gmra.mxu0 %v439
      %v689 = vpop.f32.mrf.mxu0
      %v690 = vadd.f32 %v610, %v689
      %v691 = vpop.f32.mrf.mxu0
      %v692 = vadd.f32 %v610, %v691
      %693 = vmatmul.bf16.gmra.mxu0 %v440
      %v694 = vpop.f32.mrf.mxu0
      %v695 = vadd.f32 %v610, %v694
      %v696 = vpop.f32.mrf.mxu0
      %v697 = vadd.f32 %v610, %v696
      %698 = vmatmul.bf16.gmra.mxu0 %v441
      %v699 = vpop.f32.mrf.mxu0
      %v700 = vadd.f32 %v610, %v699
      %v701 = vpop.f32.mrf.mxu0
      %v702 = vadd.f32 %v610, %v701
      %703 = vmatmul.bf16.gmra.mxu0 %v442
      %v704 = vpop.f32.mrf.mxu0
      %v705 = vadd.f32 %v610, %v704
      %v706 = vpop.f32.mrf.mxu0
      %v707 = vadd.f32 %v610, %v706
      %708 = vdwg.mxu0
      %v709 = vpack.c.bf16 %v670, %v670
      %v710 = vpack.c.bf16 %v672, %v672
      %v711 = vpack.c.bf16 %v675, %v675
      %v712 = vpack.c.bf16 %v677, %v677
      %v713 = vpack.c.bf16 %v680, %v680
      %v714 = vpack.c.bf16 %v682, %v682
      %v715 = vpack.c.bf16 %v685, %v685
      %v716 = vpack.c.bf16 %v687, %v687
      %v717 = vpack.c.bf16 %v690, %v690
      %v718 = vpack.c.bf16 %v692, %v692
      %v719 = vpack.c.bf16 %v695, %v695
      %v720 = vpack.c.bf16 %v697, %v697
      %v721 = vpack.c.bf16 %v700, %v700
      %v722 = vpack.c.bf16 %v702, %v702
      %v723 = vpack.c.bf16 %v705, %v705
      %v724 = vpack.c.bf16 %v707, %v707
      %725 = vst [vmem:[%s407] sm:$0xf] %v709
      %726 = vst [vmem:[%s407 + $0x4] sm:$0xf] %v710
      %727 = vst [vmem:[%s407 + $0x8] sm:$0xf] %v711
      %728 = vst [vmem:[%s407 + $0xc] sm:$0xf] %v712
      %729 = vst [vmem:[%s407 + $0x10] sm:$0xf] %v713
      %730 = vst [vmem:[%s407 + $0x14] sm:$0xf] %v714
      %731 = vst [vmem:[%s407 + $0x18] sm:$0xf] %v715
      %732 = vst [vmem:[%s407 + $0x1c] sm:$0xf] %v716
      %733 = vst [vmem:[%s407 + $0x20] sm:$0xf] %v717
      %734 = vst [vmem:[%s407 + $0x24] sm:$0xf] %v718
      %735 = vst [vmem:[%s407 + $0x28] sm:$0xf] %v719
      %736 = vst [vmem:[%s407 + $0x2c] sm:$0xf] %v720
      %737 = vst [vmem:[%s407 + $0x30] sm:$0xf] %v721
      %738 = vst [vmem:[%s407 + $0x34] sm:$0xf] %v722
      %739 = vst [vmem:[%s407 + $0x38] sm:$0xf] %v723
      %740 = vst [vmem:[%s407 + $0x3c] sm:$0xf] %v724
      %v741 = vld [vmem:[%s5] sm:$0xf]
      %v742 = vld [vmem:[%s5 + $0x4] sm:$0xf]
      %v743 = vld [vmem:[%s5 + $0x8] sm:$0xf]
      %v744 = vld [vmem:[%s5 + $0xc] sm:$0xf]
      %v745 = vld [vmem:[%s5 + $0x10] sm:$0xf]
      %v746 = vld [vmem:[%s5 + $0x14] sm:$0xf]
      %v747 = vld [vmem:[%s5 + $0x18] sm:$0xf]
      %v748 = vld [vmem:[%s5 + $0x1c] sm:$0xf]
      %v749 = vld [vmem:[%s5 + $0x20] sm:$0xf]
      %v750 = vld [vmem:[%s5 + $0x24] sm:$0xf]
      %v751 = vld [vmem:[%s5 + $0x28] sm:$0xf]
      %v752 = vld [vmem:[%s5 + $0x2c] sm:$0xf]
      %v753 = vld [vmem:[%s5 + $0x30] sm:$0xf]
      %v754 = vld [vmem:[%s5 + $0x34] sm:$0xf]
      %v755 = vld [vmem:[%s5 + $0x38] sm:$0xf]
      %v756 = vld [vmem:[%s5 + $0x3c] sm:$0xf]
      %v757 = vld [vmem:[%s6] sm:$0x1]
      %v759 = vperm.slane %v757, 0
      %v777 = vunpack.c.l.b16 %v741
      %v778 = vunpack.c.l.b16 %v742
      %v779 = vunpack.c.l.b16 %v743
      %v780 = vunpack.c.l.b16 %v744
      %v781 = vunpack.c.l.b16 %v745
      %v782 = vunpack.c.l.b16 %v746
      %v783 = vunpack.c.l.b16 %v747
      %v784 = vunpack.c.l.b16 %v748
      %v785 = vunpack.c.l.b16 %v749
      %v786 = vunpack.c.l.b16 %v750
      %v787 = vunpack.c.l.b16 %v751
      %v788 = vunpack.c.l.b16 %v752
      %v789 = vunpack.c.l.b16 %v753
      %v790 = vunpack.c.l.b16 %v754
      %v791 = vunpack.c.l.b16 %v755
      %v792 = vunpack.c.l.b16 %v756
      %v793 = vpack.c.b16 %v778, %v777
      %v794 = vpack.c.b16 %v780, %v779
      %v795 = vpack.c.b16 %v782, %v781
      %v796 = vpack.c.b16 %v784, %v783
      %v797 = vpack.c.b16 %v786, %v785
      %v798 = vpack.c.b16 %v788, %v787
      %v799 = vpack.c.b16 %v790, %v789
      %v800 = vpack.c.b16 %v792, %v791
      %809 = vmatpush.bf16.msra.mxu0 %v800
      %810 = vmatpush.bf16.msra.mxu0 %v799
      %811 = vmatpush.bf16.msra.mxu0 %v798
      %812 = vmatpush.bf16.msra.mxu0 %v797
      %813 = vmatpush.bf16.msra.mxu0 %v796
      %814 = vmatpush.bf16.msra.mxu0 %v795
      %815 = vmatpush.bf16.msra.mxu0 %v794
      %816 = vmatpush.bf16.msra.mxu0 %v793
      %817 = vmatmul.bf16.gmra.mxu0 %v435
      %v818 = vpop.f32.mrf.mxu0
      %v819 = vadd.f32 %v759, %v818
      %v820 = vpop.f32.mrf.mxu0
      %v821 = vadd.f32 %v759, %v820
      %822 = vmatmul.bf16.gmra.mxu0 %v436
      %v823 = vpop.f32.mrf.mxu0
      %v824 = vadd.f32 %v759, %v823
      %v825 = vpop.f32.mrf.mxu0
      %v826 = vadd.f32 %v759, %v825
      %827 = vmatmul.bf16.gmra.mxu0 %v437
      %v828 = vpop.f32.mrf.mxu0
      %v829 = vadd.f32 %v759, %v828
      %v830 = vpop.f32.mrf.mxu0
      %v831 = vadd.f32 %v759, %v830
      %832 = vmatmul.bf16.gmra.mxu0 %v438
      %v833 = vpop.f32.mrf.mxu0
      %v834 = vadd.f32 %v759, %v833
      %v835 = vpop.f32.mrf.mxu0
      %v836 = vadd.f32 %v759, %v835
      %837 = vmatmul.bf16.gmra.mxu0 %v439
      %v838 = vpop.f32.mrf.mxu0
      %v839 = vadd.f32 %v759, %v838
      %v840 = vpop.f32.mrf.mxu0
      %v841 = vadd.f32 %v759, %v840
      %842 = vmatmul.bf16.gmra.mxu0 %v440
      %v843 = vpop.f32.mrf.mxu0
      %v844 = vadd.f32 %v759, %v843
      %v845 = vpop.f32.mrf.mxu0
      %v846 = vadd.f32 %v759, %v845
      %847 = vmatmul.bf16.gmra.mxu0 %v441
      %v848 = vpop.f32.mrf.mxu0
      %v849 = vadd.f32 %v759, %v848
      %v850 = vpop.f32.mrf.mxu0
      %v851 = vadd.f32 %v759, %v850
      %852 = vmatmul.bf16.gmra.mxu0 %v442
      %v853 = vpop.f32.mrf.mxu0
      %v854 = vadd.f32 %v759, %v853
      %v855 = vpop.f32.mrf.mxu0
      %v856 = vadd.f32 %v759, %v855
      %857 = vdwg.mxu0
      %v858 = vpack.c.bf16 %v819, %v819
      %v859 = vpack.c.bf16 %v821, %v821
      %v860 = vpack.c.bf16 %v824, %v824
      %v861 = vpack.c.bf16 %v826, %v826
      %v862 = vpack.c.bf16 %v829, %v829
      %v863 = vpack.c.bf16 %v831, %v831
      %v864 = vpack.c.bf16 %v834, %v834
      %v865 = vpack.c.bf16 %v836, %v836
      %v866 = vpack.c.bf16 %v839, %v839
      %v867 = vpack.c.bf16 %v841, %v841
      %v868 = vpack.c.bf16 %v844, %v844
      %v869 = vpack.c.bf16 %v846, %v846
      %v870 = vpack.c.bf16 %v849, %v849
      %v871 = vpack.c.bf16 %v851, %v851
      %v872 = vpack.c.bf16 %v854, %v854
      %v873 = vpack.c.bf16 %v856, %v856
      %874 = vst [vmem:[%s417] sm:$0xf] %v858
      %875 = vst [vmem:[%s417 + $0x4] sm:$0xf] %v859
      %876 = vst [vmem:[%s417 + $0x8] sm:$0xf] %v860
      %877 = vst [vmem:[%s417 + $0xc] sm:$0xf] %v861
      %878 = vst [vmem:[%s417 + $0x10] sm:$0xf] %v862
      %879 = vst [vmem:[%s417 + $0x14] sm:$0xf] %v863
      %880 = vst [vmem:[%s417 + $0x18] sm:$0xf] %v864
      %881 = vst [vmem:[%s417 + $0x1c] sm:$0xf] %v865
      %882 = vst [vmem:[%s417 + $0x20] sm:$0xf] %v866
      %883 = vst [vmem:[%s417 + $0x24] sm:$0xf] %v867
      %884 = vst [vmem:[%s417 + $0x28] sm:$0xf] %v868
      %885 = vst [vmem:[%s417 + $0x2c] sm:$0xf] %v869
      %886 = vst [vmem:[%s417 + $0x30] sm:$0xf] %v870
      %887 = vst [vmem:[%s417 + $0x34] sm:$0xf] %v871
      %888 = vst [vmem:[%s417 + $0x38] sm:$0xf] %v872
      %889 = vst [vmem:[%s417 + $0x3c] sm:$0xf] %v873
      %s890 = smul.u32 16, %s26
      %p891 = scmp.lt.s32.totalorder %s25, 1
      %s892 = scalar_select %p891, %s25, 1
      %p893 = scmp.lt.s32.totalorder %s890, 31
      %s894 = scalar_select %p893, %s890, 31
      %s895 = smul.addr %s892, 32
      %s896 = sadd.s32 %s894, %s895
      %s897 = smul.addr %s896, 4
      %s898 = scalar_lea.vmem %s7, %s897
      %s899 = smul.u32 16, %s26
      %p900 = scmp.lt.s32.totalorder %s25, 1
      %s901 = scalar_select %p900, %s25, 1
      %p902 = scmp.lt.s32.totalorder %s899, 31
      %s903 = scalar_select %p902, %s899, 31
      %s904 = smul.addr %s901, 32
      %s905 = sadd.s32 %s903, %s904
      %s906 = smul.addr %s905, 4
      %s907 = scalar_lea.vmem %s8, %s906
      %s908 = smul.u32 16, %s26
      %p909 = scmp.lt.s32.totalorder %s25, 1
      %s910 = scalar_select %p909, %s25, 1
      %p911 = scmp.lt.s32.totalorder %s908, 31
      %s912 = scalar_select %p911, %s908, 31
      %s913 = smul.addr %s910, 32
      %s914 = sadd.s32 %s912, %s913
      %s915 = smul.addr %s914, 4
      %s916 = scalar_lea.vmem %s9, %s915
      // Predicated region
      $region49: #{nl_block_pallas.2} parent=47 // pred_check
        %p917 = pneg %p207
      $region50: #{nl_block_pallas.2} parent=47 // pred_check_branch
        %919 = sbr.rel (%p917) target = $region52
      $region51: #{nl_block_pallas.2} parent=47 // pred_region
        %s920 = smul.u32 16, %s26
      $region52: #{nl_block_pallas.2} parent=47 // pred_fallthru
        _
      // Predicated region
      $region53: #{nl_block_pallas.2} parent=47 // pred_check
        %p921 = pneg %p235
      $region54: #{nl_block_pallas.2} parent=47 // pred_check_branch
        %923 = sbr.rel (%p921) target = $region56
      $region55: #{nl_block_pallas.2} parent=47 // pred_region
        %s924 = smul.u32 16, %s26
      $region56: #{nl_block_pallas.2} parent=47 // pred_fallthru
        _
      // Predicated region
      $region57: #{nl_block_pallas.2} parent=47 // pred_check
        %p925 = pneg %p263
      $region58: #{nl_block_pallas.2} parent=47 // pred_check_branch
        %927 = sbr.rel (%p925) target = $region60
      $region59: #{nl_block_pallas.2} parent=47 // pred_region
        %s928 = smul.u32 16, %s26
      $region60: #{nl_block_pallas.2} parent=47 // pred_fallthru
        _
    $region48: #{nl_block_pallas.2} parent=5 // pred_fallthru
      _
    %p929 = scmp.le.s32.totalorder 2, %s16
    // Predicated region
    $region61: #{nl_block_pallas.2} parent=5 // pred_check
      %p930 = pneg %p929
    $region62: #{nl_block_pallas.2} parent=5 // pred_check_branch
      %932 = sbr.rel (%p930) target = $region64
    $region63: #{nl_block_pallas.2} parent=5 // pred_region
      %s933 = ssub.s32 %s16, 2
      // Predicated region
      $region65: #{nl_block_pallas.2} parent=63 // pred_check
        %p934 = pneg %p213
      $region66: #{nl_block_pallas.2} parent=63 // pred_check_branch
        %936 = sbr.rel (%p934) target = $region68
      $region67: #{nl_block_pallas.2} parent=63 // pred_region
        %s937 = smul.u32 16, %s28
        %p938 = scmp.lt.s32.totalorder %s27, 1
        %s939 = scalar_select %p938, %s27, 1
        %p940 = scmp.lt.s32.totalorder %s937, 31
        %s941 = scalar_select %p940, %s937, 31
        %s942 = smul.addr %s939, 32
        %s943 = sadd.s32 %s941, %s942
        %s944 = smul.addr %s943, 4
        %s945 = scalar_lea.vmem %s7, %s944
      $region68: #{nl_block_pallas.2} parent=63 // pred_fallthru
        _
      // Predicated region
      $region69: #{nl_block_pallas.2} parent=63 // pred_check
        %p946 = pneg %p241
      $region70: #{nl_block_pallas.2} parent=63 // pred_check_branch
        %948 = sbr.rel (%p946) target = $region72
      $region71: #{nl_block_pallas.2} parent=63 // pred_region
        %s949 = smul.u32 16, %s28
        %p950 = scmp.lt.s32.totalorder %s27, 1
        %s951 = scalar_select %p950, %s27, 1
        %p952 = scmp.lt.s32.totalorder %s949, 31
        %s953 = scalar_select %p952, %s949, 31
        %s954 = smul.addr %s951, 32
        %s955 = sadd.s32 %s953, %s954
        %s956 = smul.addr %s955, 4
        %s957 = scalar_lea.vmem %s8, %s956
      $region72: #{nl_block_pallas.2} parent=63 // pred_fallthru
        _
      // Predicated region
      $region73: #{nl_block_pallas.2} parent=63 // pred_check
        %p958 = pneg %p269
      $region74: #{nl_block_pallas.2} parent=63 // pred_check_branch
        %960 = sbr.rel (%p958) target = $region76
      $region75: #{nl_block_pallas.2} parent=63 // pred_region
        %s961 = smul.u32 16, %s28
        %p962 = scmp.lt.s32.totalorder %s27, 1
        %s963 = scalar_select %p962, %s27, 1
        %p964 = scmp.lt.s32.totalorder %s961, 31
        %s965 = scalar_select %p964, %s961, 31
        %s966 = smul.addr %s963, 32
        %s967 = sadd.s32 %s965, %s966
        %s968 = smul.addr %s967, 4
        %s969 = scalar_lea.vmem %s9, %s968
      $region76: #{nl_block_pallas.2} parent=63 // pred_fallthru
        _
    $region64: #{nl_block_pallas.2} parent=5 // pred_fallthru
      _
  $region6: #{nl_block_pallas.2} parent=0 // loop_footer
    %s20 = sadd.s32 1, %s16
  $region7: #{nl_block_pallas.2} parent=0 // loop_footer_branch
    %15 = sbr.rel target = $region3
  $region8: #{nl_block_pallas.2} parent=0 // loop_exit
    _

// kernel: nl_block_pallas.3
$region0: #{nl_block_pallas.3}
  #allocation0 [shape = 'u32[]', space=smem, size = 0x4, offset = 0x4, fixed_abs, tag = 'smem constant byte address 0x4 - core index']
  #allocation1 [shape = 'u32[72,128]{1,0:T(1,128)}', space=vmem, size = 0x9000, scoped, tag = 'internal scratch']
  #allocation2 [shape = 'f32[128,1]{1,0:T(8,128)}', space=vmem, size = 0x10000, scoped, tag = 'scratch operand']
  #allocation3 [shape = 'f32[128,1]{1,0:T(8,128)}', space=vmem, size = 0x10000, scoped, tag = 'scratch operand']
  #allocation4 [shape = 'f32[128,128]{1,0:T(8,128)}', space=vmem, size = 0x10000, scoped, tag = 'scratch operand']
  %s0 = inlined_call_operand.vmem [shape: bf16[2,256,128], index: 0, kind: input, shape index: {}]
  %s1 = inlined_call_operand.vmem [shape: bf16[2,256,128], index: 1, kind: input, shape index: {}]
  %s2 = inlined_call_operand.vmem [shape: bf16[2,256,128], index: 2, kind: input, shape index: {}]
  %s3 = inlined_call_operand.vmem [shape: f32[2,256,128], index: 3, kind: input, shape index: {}]
  %s4 = inlined_call_operand.vmem [shape: bf16[128,128], index: 4, kind: input, shape index: {}]
  %s5 = inlined_call_operand.vmem [shape: f32[1,128], index: 5, kind: input, shape index: {}]
  %s6 = inlined_call_operand.vmem [shape: f32[2,256,128], index: 6, kind: output, shape index: {}]
  %s7 = sld [smem:[#allocation0]]
  $region65: #{nl_block_pallas.3} parent=0
    _
  %s9 = ssub.s32 1, %s7
  %s10 = scalar_select 0, %s9, %s7
  loop: start=0, step=1, limit=10
  $region2: #{nl_block_pallas.3} parent=0 // loop_pre_header
    _
  $region3: #{nl_block_pallas.3} parent=0 // loop_header
    %s12 = sphi 0, %s16
    %p13 = scmp.ge.s32.totalorder %s12, 10
    %s19 = sphi 0, %s38
    %s20 = sphi 0, %s34
    %s21 = sphi 0, %s30
    %s22 = sphi 0, %s19
    %s23 = sphi 0, %s20
    %s24 = sphi 0, %s21
    %s25 = sphi 0, %s22
    %s26 = sphi 0, %s23
    %s27 = sphi 0, %s24
    %s43 = sphi 0, %s45
    %s46 = sphi 0, %s43
    %s47 = sphi 0, %s46
    %s63 = sphi 0, %s47
    %s71 = sphi 0, %s73
    %s74 = sphi 0, %s71
    %s75 = sphi 0, %s74
    %s91 = sphi 0, %s75
    %s99 = sphi 0, %s101
    %s102 = sphi 0, %s99
    %s103 = sphi 0, %s102
    %s119 = sphi 0, %s103
    %s127 = sphi 0, %s129
    %s130 = sphi 0, %s127
    %s131 = sphi 0, %s130
    %s147 = sphi 0, %s131
    %s151 = sphi 0, %s151
    %s153 = sphi 0, %s151
    %s154 = sphi 0, %s153
    %s168 = sphi 0, %s154
    %s172 = sphi 0, %s172
    %s174 = sphi 0, %s172
    %s175 = sphi 0, %s174
    %s189 = sphi 0, %s175
    %s197 = sphi 0, %s199
    %s200 = sphi 0, %s197
    %s201 = sphi 0, %s200
    %s217 = sphi 0, %s201
  $region4: #{nl_block_pallas.3} parent=0 // loop_header_branch
    %15 = sbr.rel (%p13) target = $region8
  $region5: #{nl_block_pallas.3} parent=0 // loop_body
    %s17 = ssub.s32 %s12, 1
    %s18 = ssub.s32 %s12, 2
    %s28 = sadd.s32 1, %s21
    %p29 = scmp.ge.s32.totalorder %s28, 2
    %s30 = scalar_select %p29, 0, %s28
    %s31 = sadd.s32 1, %s20
    %s32 = scalar_select %p29, %s31, %s20
    %p33 = scmp.ge.s32.totalorder %s32, 2
    %s34 = scalar_select %p33, 0, %s32
    %s35 = sadd.s32 1, %s19
    %s36 = scalar_select %p33, %s35, %s19
    %p37 = scmp.ge.s32.totalorder %s36, 2
    %s38 = scalar_select %p37, 0, %s36
    %s39 = ssub.s32 %s19, %s38
    %s40 = ssub.s32 %s20, %s34
    %s41 = sor.u32 %s39, %s40
    %p42 = scmp.eq.s32.totalorder %s41, 0
    %s44 = sadd.s32 %s43, 1
    %s45 = scalar_select %p42, %s43, %s44
    %p48 = pneg %p42
    %p49 = scmp.eq.s32.totalorder %s12, 7
    %p50 = por %p48, %p49
    %p51 = scmp.ne.s32.totalorder %s43, %s46
    %p52 = scmp.eq.s32.totalorder %s12, 0
    %p53 = por %p51, %p52
    %p54 = scmp.ne.s32.totalorder %s43, %s46
    %p55 = scmp.eq.s32.totalorder %s17, 7
    %p56 = por %p54, %p55
    %p57 = scmp.ne.s32.totalorder %s46, %s47
    %p58 = scmp.eq.s32.totalorder %s17, 0
    %p59 = por %p57, %p58
    %p60 = scmp.ne.s32.totalorder %s46, %s47
    %p61 = scmp.eq.s32.totalorder %s18, 7
    %p62 = por %p60, %p61
    %p64 = scmp.ne.s32.totalorder %s47, %s63
    %p65 = scmp.eq.s32.totalorder %s18, 0
    %p66 = por %p64, %p65
    %s67 = ssub.s32 %s19, %s38
    %s68 = ssub.s32 %s21, %s30
    %s69 = sor.u32 %s67, %s68
    %p70 = scmp.eq.s32.totalorder %s69, 0
    %s72 = sadd.s32 %s71, 1
    %s73 = scalar_select %p70, %s71, %s72
    %p76 = pneg %p70
    %p77 = scmp.eq.s32.totalorder %s12, 7
    %p78 = por %p76, %p77
    %p79 = scmp.ne.s32.totalorder %s71, %s74
    %p80 = scmp.eq.s32.totalorder %s12, 0
    %p81 = por %p79, %p80
    %p82 = scmp.ne.s32.totalorder %s71, %s74
    %p83 = scmp.eq.s32.totalorder %s17, 7
    %p84 = por %p82, %p83
    %p85 = scmp.ne.s32.totalorder %s74, %s75
    %p86 = scmp.eq.s32.totalorder %s17, 0
    %p87 = por %p85, %p86
    %p88 = scmp.ne.s32.totalorder %s74, %s75
    %p89 = scmp.eq.s32.totalorder %s18, 7
    %p90 = por %p88, %p89
    %p92 = scmp.ne.s32.totalorder %s75, %s91
    %p93 = scmp.eq.s32.totalorder %s18, 0
    %p94 = por %p92, %p93
    %s95 = ssub.s32 %s19, %s38
    %s96 = ssub.s32 %s21, %s30
    %s97 = sor.u32 %s95, %s96
    %p98 = scmp.eq.s32.totalorder %s97, 0
    %s100 = sadd.s32 %s99, 1
    %s101 = scalar_select %p98, %s99, %s100
    %p104 = pneg %p98
    %p105 = scmp.eq.s32.totalorder %s12, 7
    %p106 = por %p104, %p105
    %p107 = scmp.ne.s32.totalorder %s99, %s102
    %p108 = scmp.eq.s32.totalorder %s12, 0
    %p109 = por %p107, %p108
    %p110 = scmp.ne.s32.totalorder %s99, %s102
    %p111 = scmp.eq.s32.totalorder %s17, 7
    %p112 = por %p110, %p111
    %p113 = scmp.ne.s32.totalorder %s102, %s103
    %p114 = scmp.eq.s32.totalorder %s17, 0
    %p115 = por %p113, %p114
    %p116 = scmp.ne.s32.totalorder %s102, %s103
    %p117 = scmp.eq.s32.totalorder %s18, 7
    %p118 = por %p116, %p117
    %p120 = scmp.ne.s32.totalorder %s103, %s119
    %p121 = scmp.eq.s32.totalorder %s18, 0
    %p122 = por %p120, %p121
    %s123 = ssub.s32 %s19, %s38
    %s124 = ssub.s32 %s20, %s34
    %s125 = sor.u32 %s123, %s124
    %p126 = scmp.eq.s32.totalorder %s125, 0
    %s128 = sadd.s32 %s127, 1
    %s129 = scalar_select %p126, %s127, %s128
    %p132 = pneg %p126
    %p133 = scmp.eq.s32.totalorder %s12, 7
    %p134 = por %p132, %p133
    %p135 = scmp.ne.s32.totalorder %s127, %s130
    %p136 = scmp.eq.s32.totalorder %s12, 0
    %p137 = por %p135, %p136
    %p138 = scmp.ne.s32.totalorder %s127, %s130
    %p139 = scmp.eq.s32.totalorder %s17, 7
    %p140 = por %p138, %p139
    %p141 = scmp.ne.s32.totalorder %s130, %s131
    %p142 = scmp.eq.s32.totalorder %s17, 0
    %p143 = por %p141, %p142
    %p144 = scmp.ne.s32.totalorder %s130, %s131
    %p145 = scmp.eq.s32.totalorder %s18, 7
    %p146 = por %p144, %p145
    %p148 = scmp.ne.s32.totalorder %s131, %s147
    %p149 = scmp.eq.s32.totalorder %s18, 0
    %p150 = por %p148, %p149
    %s152 = sadd.s32 %s151, 1
    %p155 = scmp.eq.s32.totalorder %s12, 7
    %p156 = scmp.ne.s32.totalorder %s151, %s153
    %p157 = scmp.eq.s32.totalorder %s12, 0
    %p158 = por %p156, %p157
    %p159 = scmp.ne.s32.totalorder %s151, %s153
    %p160 = scmp.eq.s32.totalorder %s17, 7
    %p161 = por %p159, %p160
    %p162 = scmp.ne.s32.totalorder %s153, %s154
    %p163 = scmp.eq.s32.totalorder %s17, 0
    %p164 = por %p162, %p163
    %p165 = scmp.ne.s32.totalorder %s153, %s154
    %p166 = scmp.eq.s32.totalorder %s18, 7
    %p167 = por %p165, %p166
    %p169 = scmp.ne.s32.totalorder %s154, %s168
    %p170 = scmp.eq.s32.totalorder %s18, 0
    %p171 = por %p169, %p170
    %s173 = sadd.s32 %s172, 1
    %p176 = scmp.eq.s32.totalorder %s12, 7
    %p177 = scmp.ne.s32.totalorder %s172, %s174
    %p178 = scmp.eq.s32.totalorder %s12, 0
    %p179 = por %p177, %p178
    %p180 = scmp.ne.s32.totalorder %s172, %s174
    %p181 = scmp.eq.s32.totalorder %s17, 7
    %p182 = por %p180, %p181
    %p183 = scmp.ne.s32.totalorder %s174, %s175
    %p184 = scmp.eq.s32.totalorder %s17, 0
    %p185 = por %p183, %p184
    %p186 = scmp.ne.s32.totalorder %s174, %s175
    %p187 = scmp.eq.s32.totalorder %s18, 7
    %p188 = por %p186, %p187
    %p190 = scmp.ne.s32.totalorder %s175, %s189
    %p191 = scmp.eq.s32.totalorder %s18, 0
    %p192 = por %p190, %p191
    %s193 = ssub.s32 %s19, %s38
    %s194 = ssub.s32 %s20, %s34
    %s195 = sor.u32 %s193, %s194
    %p196 = scmp.eq.s32.totalorder %s195, 0
    %s198 = sadd.s32 %s197, 1
    %s199 = scalar_select %p196, %s197, %s198
    %p202 = pneg %p196
    %p203 = scmp.eq.s32.totalorder %s12, 7
    %p204 = por %p202, %p203
    %p205 = scmp.ne.s32.totalorder %s197, %s200
    %p206 = scmp.eq.s32.totalorder %s12, 0
    %p207 = por %p205, %p206
    %p208 = scmp.ne.s32.totalorder %s197, %s200
    %p209 = scmp.eq.s32.totalorder %s17, 7
    %p210 = por %p208, %p209
    %p211 = scmp.ne.s32.totalorder %s200, %s201
    %p212 = scmp.eq.s32.totalorder %s17, 0
    %p213 = por %p211, %p212
    %p214 = scmp.ne.s32.totalorder %s200, %s201
    %p215 = scmp.eq.s32.totalorder %s18, 7
    %p216 = por %p214, %p215
    %p218 = scmp.ne.s32.totalorder %s201, %s217
    %p219 = scmp.eq.s32.totalorder %s18, 0
    %p220 = por %p218, %p219
    %p221 = scmp.le.s32.totalorder 1, %s12
    %p222 = scmp.lt.s32.totalorder %s12, 9
    %p223 = pnand %p221, %p222
    %p224 = pneg %p223
    // Predicated region
    $region9: #{nl_block_pallas.3} parent=5 // pred_check
      _
    $region10: #{nl_block_pallas.3} parent=5 // pred_check_branch
      %226 = sbr.rel (%p223) target = $region12
    $region11: #{nl_block_pallas.3} parent=5 // pred_region
      %s227 = ssub.s32 %s12, 1
      // Predicated region
      $region13: #{nl_block_pallas.3} parent=11 // pred_check
        %p228 = pneg %p164
      $region14: #{nl_block_pallas.3} parent=11 // pred_check_branch
        %230 = sbr.rel (%p228) target = $region16
      $region15: #{nl_block_pallas.3} parent=11 // pred_region
        _
      $region16: #{nl_block_pallas.3} parent=11 // pred_fallthru
        _
      // Predicated region
      $region17: #{nl_block_pallas.3} parent=11 // pred_check
        %p231 = pneg %p185
      $region18: #{nl_block_pallas.3} parent=11 // pred_check_branch
        %233 = sbr.rel (%p231) target = $region20
      $region19: #{nl_block_pallas.3} parent=11 // pred_region
        _
      $region20: #{nl_block_pallas.3} parent=11 // pred_fallthru
        _
    $region12: #{nl_block_pallas.3} parent=5 // pred_fallthru
      _
    %p234 = scmp.lt.s32.totalorder %s12, 8
    // Predicated region
    $region21: #{nl_block_pallas.3} parent=5 // pred_check
      %p235 = pneg %p234
    $region22: #{nl_block_pallas.3} parent=5 // pred_check_branch
      %237 = sbr.rel (%p235) target = $region24
    $region23: #{nl_block_pallas.3} parent=5 // pred_region
      // Predicated region
      $region25: #{nl_block_pallas.3} parent=23 // pred_check
        %p238 = pneg %p53
      $region26: #{nl_block_pallas.3} parent=23 // pred_check_branch
        %240 = sbr.rel (%p238) target = $region28
      $region27: #{nl_block_pallas.3} parent=23 // pred_region
        %s241 = smul.u32 16, %s20
        %p242 = scmp.lt.s32.totalorder %s19, 1
        %s243 = scalar_select %p242, %s19, 1
        %p244 = scmp.lt.s32.totalorder %s241, 31
        %s245 = scalar_select %p244, %s241, 31
        %s246 = smul.addr %s243, 32
        %s247 = sadd.s32 %s245, %s246
        %s248 = smul.addr %s247, 4
        %s249 = scalar_lea.vmem %s0, %s248
        %s250 = smul.u32 16, %s20
      $region28: #{nl_block_pallas.3} parent=23 // pred_fallthru
        _
      // Predicated region
      $region29: #{nl_block_pallas.3} parent=23 // pred_check
        %p251 = pneg %p81
      $region30: #{nl_block_pallas.3} parent=23 // pred_check_branch
        %253 = sbr.rel (%p251) target = $region32
      $region31: #{nl_block_pallas.3} parent=23 // pred_region
        %s254 = smul.u32 16, %s21
        %p255 = scmp.lt.s32.totalorder %s19, 1
        %s256 = scalar_select %p255, %s19, 1
        %p257 = scmp.lt.s32.totalorder %s254, 31
        %s258 = scalar_select %p257, %s254, 31
        %s259 = smul.addr %s256, 32
        %s260 = sadd.s32 %s258, %s259
        %s261 = smul.addr %s260, 4
        %s262 = scalar_lea.vmem %s1, %s261
        %s263 = smul.u32 16, %s21
      $region32: #{nl_block_pallas.3} parent=23 // pred_fallthru
        _
      // Predicated region
      $region33: #{nl_block_pallas.3} parent=23 // pred_check
        %p264 = pneg %p109
      $region34: #{nl_block_pallas.3} parent=23 // pred_check_branch
        %266 = sbr.rel (%p264) target = $region36
      $region35: #{nl_block_pallas.3} parent=23 // pred_region
        %s267 = smul.u32 16, %s21
        %p268 = scmp.lt.s32.totalorder %s19, 1
        %s269 = scalar_select %p268, %s19, 1
        %p270 = scmp.lt.s32.totalorder %s267, 31
        %s271 = scalar_select %p270, %s267, 31
        %s272 = smul.addr %s269, 32
        %s273 = sadd.s32 %s271, %s272
        %s274 = smul.addr %s273, 4
        %s275 = scalar_lea.vmem %s2, %s274
        %s276 = smul.u32 16, %s21
      $region36: #{nl_block_pallas.3} parent=23 // pred_fallthru
        _
      // Predicated region
      $region37: #{nl_block_pallas.3} parent=23 // pred_check
        %p277 = pneg %p137
      $region38: #{nl_block_pallas.3} parent=23 // pred_check_branch
        %279 = sbr.rel (%p277) target = $region40
      $region39: #{nl_block_pallas.3} parent=23 // pred_region
        %s280 = smul.u32 16, %s20
        %p281 = scmp.lt.s32.totalorder %s19, 1
        %s282 = scalar_select %p281, %s19, 1
        %p283 = scmp.lt.s32.totalorder %s280, 31
        %s284 = scalar_select %p283, %s280, 31
        %s285 = smul.addr %s282, 32
        %s286 = sadd.s32 %s284, %s285
        %s287 = smul.addr %s286, 8
        %s288 = scalar_lea.vmem %s3, %s287
        %s289 = smul.u32 16, %s20
      $region40: #{nl_block_pallas.3} parent=23 // pred_fallthru
        _
    $region24: #{nl_block_pallas.3} parent=5 // pred_fallthru
      _
    %p290 = scmp.le.s32.totalorder 1, %s12
    %p291 = scmp.lt.s32.totalorder %s12, 9
    %p292 = pnand %p290, %p291
    %p293 = pneg %p292
    // Predicated region
    $region41: #{nl_block_pallas.3} parent=5 // pred_check
      _
    $region42: #{nl_block_pallas.3} parent=5 // pred_check_branch
      %295 = sbr.rel (%p292) target = $region44
    $region43: #{nl_block_pallas.3} parent=5 // pred_region
      %s296 = ssub.s32 %s12, 1
      %s297 = smul.u32 16, %s23
      %p298 = scmp.lt.s32.totalorder %s22, 1
      %s299 = scalar_select %p298, %s22, 1
      %p300 = scmp.lt.s32.totalorder %s297, 31
      %s301 = scalar_select %p300, %s297, 31
      %s302 = smul.addr %s299, 32
      %s303 = sadd.s32 %s301, %s302
      %s304 = smul.addr %s303, 4
      %s305 = scalar_lea.vmem %s0, %s304
      %p306 = pneg %p59
      %p307 = pneg %p56
      %s308 = smul.u32 16, %s24
      %p309 = scmp.lt.s32.totalorder %s22, 1
      %s310 = scalar_select %p309, %s22, 1
      %p311 = scmp.lt.s32.totalorder %s308, 31
      %s312 = scalar_select %p311, %s308, 31
      %s313 = smul.addr %s310, 32
      %s314 = sadd.s32 %s312, %s313
      %s315 = smul.addr %s314, 4
      %s316 = scalar_lea.vmem %s1, %s315
      %p317 = pneg %p87
      %p318 = pneg %p84
      %s319 = smul.u32 16, %s24
      %p320 = scmp.lt.s32.totalorder %s22, 1
      %s321 = scalar_select %p320, %s22, 1
      %p322 = scmp.lt.s32.totalorder %s319, 31
      %s323 = scalar_select %p322, %s319, 31
      %s324 = smul.addr %s321, 32
      %s325 = sadd.s32 %s323, %s324
      %s326 = smul.addr %s325, 4
      %s327 = scalar_lea.vmem %s2, %s326
      %p328 = pneg %p115
      %p329 = pneg %p112
      %s330 = smul.u32 16, %s23
      %p331 = scmp.lt.s32.totalorder %s22, 1
      %s332 = scalar_select %p331, %s22, 1
      %p333 = scmp.lt.s32.totalorder %s330, 31
      %s334 = scalar_select %p333, %s330, 31
      %s335 = smul.addr %s332, 32
      %s336 = sadd.s32 %s334, %s335
      %s337 = smul.addr %s336, 8
      %s338 = scalar_lea.vmem %s3, %s337
      %p339 = pneg %p143
      %p340 = pneg %p140
      %p341 = pneg %p164
      %p342 = pneg %p161
      %p343 = pneg %p185
      %p344 = pneg %p182
      %p345 = pneg %p213
      %p346 = pneg %p210
      %s347 = smul.u32 16, %s23
      %p348 = scmp.lt.s32.totalorder %s22, 1
      %s349 = scalar_select %p348, %s22, 1
      %p350 = scmp.lt.s32.totalorder %s347, 31
      %s351 = scalar_select %p350, %s347, 31
      %s352 = smul.addr %s349, 32
      %s353 = sadd.s32 %s351, %s352
      %s354 = smul.addr %s353, 8
      %s355 = scalar_lea.vmem %s6, %s354
      %s356 = smul.u32 16, %s23
      %p357 = scmp.lt.s32.totalorder %s22, 1
      %s358 = scalar_select %p357, %s22, 1
      %p359 = scmp.lt.s32.totalorder %s356, 31
      %s360 = scalar_select %p359, %s356, 31
      %s361 = smul.addr %s358, 32
      %s362 = sadd.s32 %s360, %s361
      %s363 = smul.addr %s362, 4
      %s364 = scalar_lea.vmem %s0, %s363
      %s365 = smul.u32 16, %s23
      %s366 = smul.u32 16, %s24
      %p367 = scmp.lt.s32.totalorder %s22, 1
      %s368 = scalar_select %p367, %s22, 1
      %p369 = scmp.lt.s32.totalorder %s366, 31
      %s370 = scalar_select %p369, %s366, 31
      %s371 = smul.addr %s368, 32
      %s372 = sadd.s32 %s370, %s371
      %s373 = smul.addr %s372, 4
      %s374 = scalar_lea.vmem %s1, %s373
      %s375 = smul.u32 16, %s24
      %s376 = smul.u32 16, %s24
      %p377 = scmp.lt.s32.totalorder %s22, 1
      %s378 = scalar_select %p377, %s22, 1
      %p379 = scmp.lt.s32.totalorder %s376, 31
      %s380 = scalar_select %p379, %s376, 31
      %s381 = smul.addr %s378, 32
      %s382 = sadd.s32 %s380, %s381
      %s383 = smul.addr %s382, 4
      %s384 = scalar_lea.vmem %s2, %s383
      %s385 = smul.u32 16, %s24
      %s386 = smul.u32 16, %s23
      %p387 = scmp.lt.s32.totalorder %s22, 1
      %s388 = scalar_select %p387, %s22, 1
      %p389 = scmp.lt.s32.totalorder %s386, 31
      %s390 = scalar_select %p389, %s386, 31
      %s391 = smul.addr %s388, 32
      %s392 = sadd.s32 %s390, %s391
      %s393 = smul.addr %s392, 8
      %s394 = scalar_lea.vmem %s3, %s393
      %s395 = smul.u32 16, %s23
      %s396 = smul.u32 16, %s23
      %p397 = scmp.lt.s32.totalorder %s22, 1
      %s398 = scalar_select %p397, %s22, 1
      %p399 = scmp.lt.s32.totalorder %s396, 31
      %s400 = scalar_select %p399, %s396, 31
      %s401 = smul.addr %s398, 32
      %s402 = sadd.s32 %s400, %s401
      %s403 = smul.addr %s402, 8
      %s404 = scalar_lea.vmem %s6, %s403
      %s405 = smul.u32 16, %s23
      %p406 = scmp.eq.s32.totalorder %s24, 0
      // Predicated region
      $region45: #{nl_block_pallas.3} parent=43 // pred_check
        %p407 = pneg %p406
      $region46: #{nl_block_pallas.3} parent=43 // pred_check_branch
        %409 = sbr.rel (%p407) target = $region48
      $region47: #{nl_block_pallas.3} parent=43 // pred_region
        %vm410 = vcmask 7168
        %411 = vst.msk [vmem:[#allocation2] sm:$0xff] %vm410, -inf
        %412 = vst.msk [vmem:[#allocation2 + $0x8] sm:$0xff] %vm410, -inf
        %413 = vst.msk [vmem:[#allocation2 + $0x10] sm:$0xff] %vm410, -inf
        %414 = vst.msk [vmem:[#allocation2 + $0x18] sm:$0xff] %vm410, -inf
        %415 = vst.msk [vmem:[#allocation2 + $0x20] sm:$0xff] %vm410, -inf
        %416 = vst.msk [vmem:[#allocation2 + $0x28] sm:$0xff] %vm410, -inf
        %417 = vst.msk [vmem:[#allocation2 + $0x30] sm:$0xff] %vm410, -inf
        %418 = vst.msk [vmem:[#allocation2 + $0x38] sm:$0xff] %vm410, -inf
        %419 = vst.msk [vmem:[#allocation2 + $0x40] sm:$0xff] %vm410, -inf
        %420 = vst.msk [vmem:[#allocation2 + $0x48] sm:$0xff] %vm410, -inf
        %421 = vst.msk [vmem:[#allocation2 + $0x50] sm:$0xff] %vm410, -inf
        %422 = vst.msk [vmem:[#allocation2 + $0x58] sm:$0xff] %vm410, -inf
        %423 = vst.msk [vmem:[#allocation2 + $0x60] sm:$0xff] %vm410, -inf
        %424 = vst.msk [vmem:[#allocation2 + $0x68] sm:$0xff] %vm410, -inf
        %425 = vst.msk [vmem:[#allocation2 + $0x70] sm:$0xff] %vm410, -inf
        %426 = vst.msk [vmem:[#allocation2 + $0x78] sm:$0xff] %vm410, -inf
        %427 = vst.msk [vmem:[#allocation3] sm:$0xff] %vm410, 0.0
        %428 = vst.msk [vmem:[#allocation3 + $0x8] sm:$0xff] %vm410, 0.0
        %429 = vst.msk [vmem:[#allocation3 + $0x10] sm:$0xff] %vm410, 0.0
        %430 = vst.msk [vmem:[#allocation3 + $0x18] sm:$0xff] %vm410, 0.0
        %431 = vst.msk [vmem:[#allocation3 + $0x20] sm:$0xff] %vm410, 0.0
        %432 = vst.msk [vmem:[#allocation3 + $0x28] sm:$0xff] %vm410, 0.0
        %433 = vst.msk [vmem:[#allocation3 + $0x30] sm:$0xff] %vm410, 0.0
        %434 = vst.msk [vmem:[#allocation3 + $0x38] sm:$0xff] %vm410, 0.0
        %435 = vst.msk [vmem:[#allocation3 + $0x40] sm:$0xff] %vm410, 0.0
        %436 = vst.msk [vmem:[#allocation3 + $0x48] sm:$0xff] %vm410, 0.0
        %437 = vst.msk [vmem:[#allocation3 + $0x50] sm:$0xff] %vm410, 0.0
        %438 = vst.msk [vmem:[#allocation3 + $0x58] sm:$0xff] %vm410, 0.0
        %439 = vst.msk [vmem:[#allocation3 + $0x60] sm:$0xff] %vm410, 0.0
        %440 = vst.msk [vmem:[#allocation3 + $0x68] sm:$0xff] %vm410, 0.0
        %441 = vst.msk [vmem:[#allocation3 + $0x70] sm:$0xff] %vm410, 0.0
        %442 = vst.msk [vmem:[#allocation3 + $0x78] sm:$0xff] %vm410, 0.0
        %443 = vst [vmem:[#allocation4] sm:$0xff] 0.0
        %444 = vst [vmem:[#allocation4 + $0x8] sm:$0xff] 0.0
        %445 = vst [vmem:[#allocation4 + $0x10] sm:$0xff] 0.0
        %446 = vst [vmem:[#allocation4 + $0x18] sm:$0xff] 0.0
        %447 = vst [vmem:[#allocation4 + $0x20] sm:$0xff] 0.0
        %448 = vst [vmem:[#allocation4 + $0x28] sm:$0xff] 0.0
        %449 = vst [vmem:[#allocation4 + $0x30] sm:$0xff] 0.0
        %450 = vst [vmem:[#allocation4 + $0x38] sm:$0xff] 0.0
        %451 = vst [vmem:[#allocation4 + $0x40] sm:$0xff] 0.0
        %452 = vst [vmem:[#allocation4 + $0x48] sm:$0xff] 0.0
        %453 = vst [vmem:[#allocation4 + $0x50] sm:$0xff] 0.0
        %454 = vst [vmem:[#allocation4 + $0x58] sm:$0xff] 0.0
        %455 = vst [vmem:[#allocation4 + $0x60] sm:$0xff] 0.0
        %456 = vst [vmem:[#allocation4 + $0x68] sm:$0xff] 0.0
        %457 = vst [vmem:[#allocation4 + $0x70] sm:$0xff] 0.0
        %458 = vst [vmem:[#allocation4 + $0x78] sm:$0xff] 0.0
      $region48: #{nl_block_pallas.3} parent=43 // pred_fallthru
        _
      %v459 = vld [vmem:[%s364] sm:$0xf]
      %v460 = vld [vmem:[%s364 + $0x4] sm:$0xf]
      %v461 = vld [vmem:[%s364 + $0x8] sm:$0xf]
      %v462 = vld [vmem:[%s364 + $0xc] sm:$0xf]
      %v463 = vld [vmem:[%s364 + $0x10] sm:$0xf]
      %v464 = vld [vmem:[%s364 + $0x14] sm:$0xf]
      %v465 = vld [vmem:[%s364 + $0x18] sm:$0xf]
      %v466 = vld [vmem:[%s364 + $0x1c] sm:$0xf]
      %v467 = vld [vmem:[%s364 + $0x20] sm:$0xf]
      %v468 = vld [vmem:[%s364 + $0x24] sm:$0xf]
      %v469 = vld [vmem:[%s364 + $0x28] sm:$0xf]
      %v470 = vld [vmem:[%s364 + $0x2c] sm:$0xf]
      %v471 = vld [vmem:[%s364 + $0x30] sm:$0xf]
      %v472 = vld [vmem:[%s364 + $0x34] sm:$0xf]
      %v473 = vld [vmem:[%s364 + $0x38] sm:$0xf]
      %v474 = vld [vmem:[%s364 + $0x3c] sm:$0xf]
      %v475 = vld [vmem:[%s374] sm:$0xf]
      %v476 = vld [vmem:[%s374 + $0x4] sm:$0xf]
      %v477 = vld [vmem:[%s374 + $0x8] sm:$0xf]
      %v478 = vld [vmem:[%s374 + $0xc] sm:$0xf]
      %v479 = vld [vmem:[%s374 + $0x10] sm:$0xf]
      %v480 = vld [vmem:[%s374 + $0x14] sm:$0xf]
      %v481 = vld [vmem:[%s374 + $0x18] sm:$0xf]
      %v482 = vld [vmem:[%s374 + $0x1c] sm:$0xf]
      %v483 = vld [vmem:[%s374 + $0x20] sm:$0xf]
      %v484 = vld [vmem:[%s374 + $0x24] sm:$0xf]
      %v485 = vld [vmem:[%s374 + $0x28] sm:$0xf]
      %v486 = vld [vmem:[%s374 + $0x2c] sm:$0xf]
      %v487 = vld [vmem:[%s374 + $0x30] sm:$0xf]
      %v488 = vld [vmem:[%s374 + $0x34] sm:$0xf]
      %v489 = vld [vmem:[%s374 + $0x38] sm:$0xf]
      %v490 = vld [vmem:[%s374 + $0x3c] sm:$0xf]
      %v507 = vunpack.c.l.b16 %v459
      %v508 = vunpack.c.l.b16 %v460
      %v509 = vunpack.c.l.b16 %v461
      %v510 = vunpack.c.l.b16 %v462
      %v511 = vunpack.c.l.b16 %v463
      %v512 = vunpack.c.l.b16 %v464
      %v513 = vunpack.c.l.b16 %v465
      %v514 = vunpack.c.l.b16 %v466
      %v515 = vunpack.c.l.b16 %v467
      %v516 = vunpack.c.l.b16 %v468
      %v517 = vunpack.c.l.b16 %v469
      %v518 = vunpack.c.l.b16 %v470
      %v519 = vunpack.c.l.b16 %v471
      %v520 = vunpack.c.l.b16 %v472
      %v521 = vunpack.c.l.b16 %v473
      %v522 = vunpack.c.l.b16 %v474
      %v523 = vpack.c.b16 %v508, %v507
      %v524 = vpack.c.b16 %v510, %v509
      %v525 = vpack.c.b16 %v512, %v511
      %v526 = vpack.c.b16 %v514, %v513
      %v527 = vpack.c.b16 %v516, %v515
      %v528 = vpack.c.b16 %v518, %v517
      %v529 = vpack.c.b16 %v520, %v519
      %v530 = vpack.c.b16 %v522, %v521
      %v555 = vunpack.c.l.b16 %v475
      %v556 = vunpack.c.l.b16 %v476
      %v557 = vunpack.c.l.b16 %v477
      %v558 = vunpack.c.l.b16 %v478
      %v559 = vunpack.c.l.b16 %v479
      %v560 = vunpack.c.l.b16 %v480
      %v561 = vunpack.c.l.b16 %v481
      %v562 = vunpack.c.l.b16 %v482
      %v563 = vunpack.c.l.b16 %v483
      %v564 = vunpack.c.l.b16 %v484
      %v565 = vunpack.c.l.b16 %v485
      %v566 = vunpack.c.l.b16 %v486
      %v567 = vunpack.c.l.b16 %v487
      %v568 = vunpack.c.l.b16 %v488
      %v569 = vunpack.c.l.b16 %v489
      %v570 = vunpack.c.l.b16 %v490
      %v571 = vpack.c.b16 %v556, %v555
      %v572 = vpack.c.b16 %v558, %v557
      %v573 = vpack.c.b16 %v560, %v559
      %v574 = vpack.c.b16 %v562, %v561
      %v575 = vpack.c.b16 %v564, %v563
      %v576 = vpack.c.b16 %v566, %v565
      %v577 = vpack.c.b16 %v568, %v567
      %v578 = vpack.c.b16 %v570, %v569
      %587 = vmatpush.bf16.xpose.msra.mxu0 %v578
      %588 = vmatpush.bf16.xpose.msra.mxu0 %v577
      %589 = vmatpush.bf16.xpose.msra.mxu0 %v576
      %590 = vmatpush.bf16.xpose.msra.mxu0 %v575
      %591 = vmatpush.bf16.xpose.msra.mxu0 %v574
      %592 = vmatpush.bf16.xpose.msra.mxu0 %v573
      %593 = vmatpush.bf16.xpose.msra.mxu0 %v572
      %594 = vmatpush.bf16.xpose.msra.mxu0 %v571
      %595 = vmatmul.bf16.gmra.mxu0 %v523
      %v596 = vpop.f32.mrf.mxu0
      %v597 = vadd.f32 0.0, %v596
      %v598 = vpop.f32.mrf.mxu0
      %v599 = vadd.f32 0.0, %v598
      %600 = vmatmul.bf16.gmra.mxu0 %v524
      %v601 = vpop.f32.mrf.mxu0
      %v602 = vadd.f32 0.0, %v601
      %v603 = vpop.f32.mrf.mxu0
      %v604 = vadd.f32 0.0, %v603
      %605 = vmatmul.bf16.gmra.mxu0 %v525
      %v606 = vpop.f32.mrf.mxu0
      %v607 = vadd.f32 0.0, %v606
      %v608 = vpop.f32.mrf.mxu0
      %v609 = vadd.f32 0.0, %v608
      %610 = vmatmul.bf16.gmra.mxu0 %v526
      %v611 = vpop.f32.mrf.mxu0
      %v612 = vadd.f32 0.0, %v611
      %v613 = vpop.f32.mrf.mxu0
      %v614 = vadd.f32 0.0, %v613
      %615 = vmatmul.bf16.gmra.mxu0 %v527
      %v616 = vpop.f32.mrf.mxu0
      %v617 = vadd.f32 0.0, %v616
      %v618 = vpop.f32.mrf.mxu0
      %v619 = vadd.f32 0.0, %v618
      %620 = vmatmul.bf16.gmra.mxu0 %v528
      %v621 = vpop.f32.mrf.mxu0
      %v622 = vadd.f32 0.0, %v621
      %v623 = vpop.f32.mrf.mxu0
      %v624 = vadd.f32 0.0, %v623
      %625 = vmatmul.bf16.gmra.mxu0 %v529
      %v626 = vpop.f32.mrf.mxu0
      %v627 = vadd.f32 0.0, %v626
      %v628 = vpop.f32.mrf.mxu0
      %v629 = vadd.f32 0.0, %v628
      %630 = vmatmul.bf16.gmra.mxu0 %v530
      %v631 = vpop.f32.mrf.mxu0
      %v632 = vadd.f32 0.0, %v631
      %v633 = vpop.f32.mrf.mxu0
      %v634 = vadd.f32 0.0, %v633
      %635 = vdwg.mxu0
      %v636 = vld [vmem:[#allocation2] sm:$0xff]
      %v637 = vld [vmem:[#allocation2 + $0x8] sm:$0xff]
      %v638 = vld [vmem:[#allocation2 + $0x10] sm:$0xff]
      %v639 = vld [vmem:[#allocation2 + $0x18] sm:$0xff]
      %v640 = vld [vmem:[#allocation2 + $0x20] sm:$0xff]
      %v641 = vld [vmem:[#allocation2 + $0x28] sm:$0xff]
      %v642 = vld [vmem:[#allocation2 + $0x30] sm:$0xff]
      %v643 = vld [vmem:[#allocation2 + $0x38] sm:$0xff]
      %v644 = vld [vmem:[#allocation2 + $0x40] sm:$0xff]
      %v645 = vld [vmem:[#allocation2 + $0x48] sm:$0xff]
      %v646 = vld [vmem:[#allocation2 + $0x50] sm:$0xff]
      %v647 = vld [vmem:[#allocation2 + $0x58] sm:$0xff]
      %v648 = vld [vmem:[#allocation2 + $0x60] sm:$0xff]
      %v649 = vld [vmem:[#allocation2 + $0x68] sm:$0xff]
      %v650 = vld [vmem:[#allocation2 + $0x70] sm:$0xff]
      %v651 = vld [vmem:[#allocation2 + $0x78] sm:$0xff]
      %652 = vmax.xlane.f32.xlu0 %v597
      %v653 = vpop.xlane.xlu0 %652
      %654 = vmax.xlane.f32.xlu0 %v599
      %v655 = vpop.xlane.xlu0 %654
      %656 = vmax.xlane.f32.xlu0 %v602
      %v657 = vpop.xlane.xlu0 %656
      %658 = vmax.xlane.f32.xlu0 %v604
      %v659 = vpop.xlane.xlu0 %658
      %660 = vmax.xlane.f32.xlu0 %v607
      %v661 = vpop.xlane.xlu0 %660
      %662 = vmax.xlane.f32.xlu0 %v609
      %v663 = vpop.xlane.xlu0 %662
      %664 = vmax.xlane.f32.xlu0 %v612
      %v665 = vpop.xlane.xlu0 %664
      %666 = vmax.xlane.f32.xlu0 %v614
      %v667 = vpop.xlane.xlu0 %666
      %668 = vmax.xlane.f32.xlu0 %v617
      %v669 = vpop.xlane.xlu0 %668
      %670 = vmax.xlane.f32.xlu0 %v619
      %v671 = vpop.xlane.xlu0 %670
      %672 = vmax.xlane.f32.xlu0 %v622
      %v673 = vpop.xlane.xlu0 %672
      %674 = vmax.xlane.f32.xlu0 %v624
      %v675 = vpop.xlane.xlu0 %674
      %676 = vmax.xlane.f32.xlu0 %v627
      %v677 = vpop.xlane.xlu0 %676
      %678 = vmax.xlane.f32.xlu0 %v629
      %v679 = vpop.xlane.xlu0 %678
      %680 = vmax.xlane.f32.xlu0 %v632
      %v681 = vpop.xlane.xlu0 %680
      %682 = vmax.xlane.f32.xlu0 %v634
      %v683 = vpop.xlane.xlu0 %682
      %v684 = vmax.f32 %v636, %v653
      %v685 = vmax.f32 %v637, %v655
      %v686 = vmax.f32 %v638, %v657
      %v687 = vmax.f32 %v639, %v659
      %v688 = vmax.f32 %v640, %v661
      %v689 = vmax.f32 %v641, %v663
      %v690 = vmax.f32 %v642, %v665
      %v691 = vmax.f32 %v643, %v667
      %v692 = vmax.f32 %v644, %v669
      %v693 = vmax.f32 %v645, %v671
      %v694 = vmax.f32 %v646, %v673
      %v695 = vmax.f32 %v647, %v675
      %v696 = vmax.f32 %v648, %v677
      %v697 = vmax.f32 %v649, %v679
      %v698 = vmax.f32 %v650, %v681
      %v699 = vmax.f32 %v651, %v683
      %v700 = vsub.f32 %v636, %v684
      %v701 = vsub.f32 %v637, %v685
      %v702 = vsub.f32 %v638, %v686
      %v703 = vsub.f32 %v639, %v687
      %v704 = vsub.f32 %v640, %v688
      %v705 = vsub.f32 %v641, %v689
      %v706 = vsub.f32 %v642, %v690
      %v707 = vsub.f32 %v643, %v691
      %v708 = vsub.f32 %v644, %v692
      %v709 = vsub.f32 %v645, %v693
      %v710 = vsub.f32 %v646, %v694
      %v711 = vsub.f32 %v647, %v695
      %v712 = vsub.f32 %v648, %v696
      %v713 = vsub.f32 %v649, %v697
      %v714 = vsub.f32 %v650, %v698
      %v715 = vsub.f32 %v651, %v699
      %v716 = vmul.f32 %v700, 1.442695
      %v717 = vpow.pop %v716
      %v718 = vmul.f32 %v701, 1.442695
      %v719 = vpow.pop %v718
      %v720 = vmul.f32 %v702, 1.442695
      %v721 = vpow.pop %v720
      %v722 = vmul.f32 %v703, 1.442695
      %v723 = vpow.pop %v722
      %v724 = vmul.f32 %v704, 1.442695
      %v725 = vpow.pop %v724
      %v726 = vmul.f32 %v705, 1.442695
      %v727 = vpow.pop %v726
      %v728 = vmul.f32 %v706, 1.442695
      %v729 = vpow.pop %v728
      %v730 = vmul.f32 %v707, 1.442695
      %v731 = vpow.pop %v730
      %v732 = vmul.f32 %v708, 1.442695
      %v733 = vpow.pop %v732
      %v734 = vmul.f32 %v709, 1.442695
      %v735 = vpow.pop %v734
      %v736 = vmul.f32 %v710, 1.442695
      %v737 = vpow.pop %v736
      %v738 = vmul.f32 %v711, 1.442695
      %v739 = vpow.pop %v738
      %v740 = vmul.f32 %v712, 1.442695
      %v741 = vpow.pop %v740
      %v742 = vmul.f32 %v713, 1.442695
      %v743 = vpow.pop %v742
      %v744 = vmul.f32 %v714, 1.442695
      %v745 = vpow.pop %v744
      %v746 = vmul.f32 %v715, 1.442695
      %v747 = vpow.pop %v746
      %749 = vset.pattern.permute.xlu0 0
      %750 = vperm.xlu0 %749, %v684
      %v751 = vpop.permute.xlu0 %750
      %754 = vset.pattern.permute.xlu0 0
      %755 = vperm.xlu0 %754, %v685
      %v756 = vpop.permute.xlu0 %755
      %759 = vset.pattern.permute.xlu0 0
      %760 = vperm.xlu0 %759, %v686
      %v761 = vpop.permute.xlu0 %760
      %764 = vset.pattern.permute.xlu0 0
      %765 = vperm.xlu0 %764, %v687
      %v766 = vpop.permute.xlu0 %765
      %769 = vset.pattern.permute.xlu0 0
      %770 = vperm.xlu0 %769, %v688
      %v771 = vpop.permute.xlu0 %770
      %774 = vset.pattern.permute.xlu0 0
      %775 = vperm.xlu0 %774, %v689
      %v776 = vpop.permute.xlu0 %775
      %779 = vset.pattern.permute.xlu0 0
      %780 = vperm.xlu0 %779, %v690
      %v781 = vpop.permute.xlu0 %780
      %784 = vset.pattern.permute.xlu0 0
      %785 = vperm.xlu0 %784, %v691
      %v786 = vpop.permute.xlu0 %785
      %789 = vset.pattern.permute.xlu0 0
      %790 = vperm.xlu0 %789, %v692
      %v791 = vpop.permute.xlu0 %790
      %794 = vset.pattern.permute.xlu0 0
      %795 = vperm.xlu0 %794, %v693
      %v796 = vpop.permute.xlu0 %795
      %799 = vset.pattern.permute.xlu0 0
      %800 = vperm.xlu0 %799, %v694
      %v801 = vpop.permute.xlu0 %800
      %804 = vset.pattern.permute.xlu0 0
      %805 = vperm.xlu0 %804, %v695
      %v806 = vpop.permute.xlu0 %805
      %809 = vset.pattern.permute.xlu0 0
      %810 = vperm.xlu0 %809, %v696
      %v811 = vpop.permute.xlu0 %810
      %814 = vset.pattern.permute.xlu0 0
      %815 = vperm.xlu0 %814, %v697
      %v816 = vpop.permute.xlu0 %815
      %819 = vset.pattern.permute.xlu0 0
      %820 = vperm.xlu0 %819, %v698
      %v821 = vpop.permute.xlu0 %820
      %824 = vset.pattern.permute.xlu0 0
      %825 = vperm.xlu0 %824, %v699
      %v826 = vpop.permute.xlu0 %825
      %v828 = vsub.f32 %v597, %v751
      %v829 = vsub.f32 %v599, %v756
      %v830 = vsub.f32 %v602, %v761
      %v831 = vsub.f32 %v604, %v766
      %v832 = vsub.f32 %v607, %v771
      %v833 = vsub.f32 %v609, %v776
      %v834 = vsub.f32 %v612, %v781
      %v835 = vsub.f32 %v614, %v786
      %v836 = vsub.f32 %v617, %v791
      %v837 = vsub.f32 %v619, %v796
      %v838 = vsub.f32 %v622, %v801
      %v839 = vsub.f32 %v624, %v806
      %v840 = vsub.f32 %v627, %v811
      %v841 = vsub.f32 %v629, %v816
      %v842 = vsub.f32 %v632, %v821
      %v843 = vsub.f32 %v634, %v826
      %v844 = vmul.f32 %v828, 1.442695
      %v845 = vpow.pop %v844
      %v846 = vmul.f32 %v829, 1.442695
      %v847 = vpow.pop %v846
      %v848 = vmul.f32 %v830, 1.442695
      %v849 = vpow.pop %v848
      %v850 = vmul.f32 %v831, 1.442695
      %v851 = vpow.pop %v850
      %v852 = vmul.f32 %v832, 1.442695
      %v853 = vpow.pop %v852
      %v854 = vmul.f32 %v833, 1.442695
      %v855 = vpow.pop %v854
      %v856 = vmul.f32 %v834, 1.442695
      %v857 = vpow.pop %v856
      %v858 = vmul.f32 %v835, 1.442695
      %v859 = vpow.pop %v858
      %v860 = vmul.f32 %v836, 1.442695
      %v861 = vpow.pop %v860
      %v862 = vmul.f32 %v837, 1.442695
      %v863 = vpow.pop %v862
      %v864 = vmul.f32 %v838, 1.442695
      %v865 = vpow.pop %v864
      %v866 = vmul.f32 %v839, 1.442695
      %v867 = vpow.pop %v866
      %v868 = vmul.f32 %v840, 1.442695
      %v869 = vpow.pop %v868
      %v870 = vmul.f32 %v841, 1.442695
      %v871 = vpow.pop %v870
      %v872 = vmul.f32 %v842, 1.442695
      %v873 = vpow.pop %v872
      %v874 = vmul.f32 %v843, 1.442695
      %v875 = vpow.pop %v874
      %v876 = vld [vmem:[#allocation3] sm:$0xff]
      %v877 = vld [vmem:[#allocation3 + $0x8] sm:$0xff]
      %v878 = vld [vmem:[#allocation3 + $0x10] sm:$0xff]
      %v879 = vld [vmem:[#allocation3 + $0x18] sm:$0xff]
      %v880 = vld [vmem:[#allocation3 + $0x20] sm:$0xff]
      %v881 = vld [vmem:[#allocation3 + $0x28] sm:$0xff]
      %v882 = vld [vmem:[#allocation3 + $0x30] sm:$0xff]
      %v883 = vld [vmem:[#allocation3 + $0x38] sm:$0xff]
      %v884 = vld [vmem:[#allocation3 + $0x40] sm:$0xff]
      %v885 = vld [vmem:[#allocation3 + $0x48] sm:$0xff]
      %v886 = vld [vmem:[#allocation3 + $0x50] sm:$0xff]
      %v887 = vld [vmem:[#allocation3 + $0x58] sm:$0xff]
      %v888 = vld [vmem:[#allocation3 + $0x60] sm:$0xff]
      %v889 = vld [vmem:[#allocation3 + $0x68] sm:$0xff]
      %v890 = vld [vmem:[#allocation3 + $0x70] sm:$0xff]
      %v891 = vld [vmem:[#allocation3 + $0x78] sm:$0xff]
      %v892 = vmul.f32 %v717, %v876
      %v893 = vmul.f32 %v719, %v877
      %v894 = vmul.f32 %v721, %v878
      %v895 = vmul.f32 %v723, %v879
      %v896 = vmul.f32 %v725, %v880
      %v897 = vmul.f32 %v727, %v881
      %v898 = vmul.f32 %v729, %v882
      %v899 = vmul.f32 %v731, %v883
      %v900 = vmul.f32 %v733, %v884
      %v901 = vmul.f32 %v735, %v885
      %v902 = vmul.f32 %v737, %v886
      %v903 = vmul.f32 %v739, %v887
      %v904 = vmul.f32 %v741, %v888
      %v905 = vmul.f32 %v743, %v889
      %v906 = vmul.f32 %v745, %v890
      %v907 = vmul.f32 %v747, %v891
      %908 = vadd.xlane.f32.xlu0 %v845
      %v909 = vpop.xlane.xlu0 %908
      %910 = vadd.xlane.f32.xlu0 %v847
      %v911 = vpop.xlane.xlu0 %910
      %912 = vadd.xlane.f32.xlu0 %v849
      %v913 = vpop.xlane.xlu0 %912
      %914 = vadd.xlane.f32.xlu0 %v851
      %v915 = vpop.xlane.xlu0 %914
      %916 = vadd.xlane.f32.xlu0 %v853
      %v917 = vpop.xlane.xlu0 %916
      %918 = vadd.xlane.f32.xlu0 %v855
      %v919 = vpop.xlane.xlu0 %918
      %920 = vadd.xlane.f32.xlu0 %v857
      %v921 = vpop.xlane.xlu0 %920
      %922 = vadd.xlane.f32.xlu0 %v859
      %v923 = vpop.xlane.xlu0 %922
      %924 = vadd.xlane.f32.xlu0 %v861
      %v925 = vpop.xlane.xlu0 %924
      %926 = vadd.xlane.f32.xlu0 %v863
      %v927 = vpop.xlane.xlu0 %926
      %928 = vadd.xlane.f32.xlu0 %v865
      %v929 = vpop.xlane.xlu0 %928
      %930 = vadd.xlane.f32.xlu0 %v867
      %v931 = vpop.xlane.xlu0 %930
      %932 = vadd.xlane.f32.xlu0 %v869
      %v933 = vpop.xlane.xlu0 %932
      %934 = vadd.xlane.f32.xlu0 %v871
      %v935 = vpop.xlane.xlu0 %934
      %936 = vadd.xlane.f32.xlu0 %v873
      %v937 = vpop.xlane.xlu0 %936
      %938 = vadd.xlane.f32.xlu0 %v875
      %v939 = vpop.xlane.xlu0 %938
      %v940 = vadd.f32 %v892, %v909
      %v941 = vadd.f32 %v893, %v911
      %v942 = vadd.f32 %v894, %v913
      %v943 = vadd.f32 %v895, %v915
      %v944 = vadd.f32 %v896, %v917
      %v945 = vadd.f32 %v897, %v919
      %v946 = vadd.f32 %v898, %v921
      %v947 = vadd.f32 %v899, %v923
      %v948 = vadd.f32 %v900, %v925
      %v949 = vadd.f32 %v901, %v927
      %v950 = vadd.f32 %v902, %v929
      %v951 = vadd.f32 %v903, %v931
      %v952 = vadd.f32 %v904, %v933
      %v953 = vadd.f32 %v905, %v935
      %v954 = vadd.f32 %v906, %v937
      %v955 = vadd.f32 %v907, %v939
      %vm956 = vcmask 7168
      %957 = vst.msk [vmem:[#allocation3] sm:$0xff] %vm956, %v940
      %958 = vst.msk [vmem:[#allocation3 + $0x8] sm:$0xff] %vm956, %v941
      %959 = vst.msk [vmem:[#allocation3 + $0x10] sm:$0xff] %vm956, %v942
      %960 = vst.msk [vmem:[#allocation3 + $0x18] sm:$0xff] %vm956, %v943
      %961 = vst.msk [vmem:[#allocation3 + $0x20] sm:$0xff] %vm956, %v944
      %962 = vst.msk [vmem:[#allocation3 + $0x28] sm:$0xff] %vm956, %v945
      %963 = vst.msk [vmem:[#allocation3 + $0x30] sm:$0xff] %vm956, %v946
      %964 = vst.msk [vmem:[#allocation3 + $0x38] sm:$0xff] %vm956, %v947
      %965 = vst.msk [vmem:[#allocation3 + $0x40] sm:$0xff] %vm956, %v948
      %966 = vst.msk [vmem:[#allocation3 + $0x48] sm:$0xff] %vm956, %v949
      %967 = vst.msk [vmem:[#allocation3 + $0x50] sm:$0xff] %vm956, %v950
      %968 = vst.msk [vmem:[#allocation3 + $0x58] sm:$0xff] %vm956, %v951
      %969 = vst.msk [vmem:[#allocation3 + $0x60] sm:$0xff] %vm956, %v952
      %970 = vst.msk [vmem:[#allocation3 + $0x68] sm:$0xff] %vm956, %v953
      %971 = vst.msk [vmem:[#allocation3 + $0x70] sm:$0xff] %vm956, %v954
      %972 = vst.msk [vmem:[#allocation3 + $0x78] sm:$0xff] %vm956, %v955
      %v973 = vpack.c.bf16 %v847, %v845
      %v974 = vpack.c.bf16 %v851, %v849
      %v975 = vpack.c.bf16 %v855, %v853
      %v976 = vpack.c.bf16 %v859, %v857
      %v977 = vpack.c.bf16 %v863, %v861
      %v978 = vpack.c.bf16 %v867, %v865
      %v979 = vpack.c.bf16 %v871, %v869
      %v980 = vpack.c.bf16 %v875, %v873
      %v981 = vld [vmem:[%s384] sm:$0xf]
      %v982 = vld [vmem:[%s384 + $0x4] sm:$0xf]
      %v983 = vld [vmem:[%s384 + $0x8] sm:$0xf]
      %v984 = vld [vmem:[%s384 + $0xc] sm:$0xf]
      %v985 = vld [vmem:[%s384 + $0x10] sm:$0xf]
      %v986 = vld [vmem:[%s384 + $0x14] sm:$0xf]
      %v987 = vld [vmem:[%s384 + $0x18] sm:$0xf]
      %v988 = vld [vmem:[%s384 + $0x1c] sm:$0xf]
      %v989 = vld [vmem:[%s384 + $0x20] sm:$0xf]
      %v990 = vld [vmem:[%s384 + $0x24] sm:$0xf]
      %v991 = vld [vmem:[%s384 + $0x28] sm:$0xf]
      %v992 = vld [vmem:[%s384 + $0x2c] sm:$0xf]
      %v993 = vld [vmem:[%s384 + $0x30] sm:$0xf]
      %v994 = vld [vmem:[%s384 + $0x34] sm:$0xf]
      %v995 = vld [vmem:[%s384 + $0x38] sm:$0xf]
      %v996 = vld [vmem:[%s384 + $0x3c] sm:$0xf]
      %v1013 = vunpack.c.l.b16 %v981
      %v1014 = vunpack.c.l.b16 %v982
      %v1015 = vunpack.c.l.b16 %v983
      %v1016 = vunpack.c.l.b16 %v984
      %v1017 = vunpack.c.l.b16 %v985
      %v1018 = vunpack.c.l.b16 %v986
      %v1019 = vunpack.c.l.b16 %v987
      %v1020 = vunpack.c.l.b16 %v988
      %v1021 = vunpack.c.l.b16 %v989
      %v1022 = vunpack.c.l.b16 %v990
      %v1023 = vunpack.c.l.b16 %v991
      %v1024 = vunpack.c.l.b16 %v992
      %v1025 = vunpack.c.l.b16 %v993
      %v1026 = vunpack.c.l.b16 %v994
      %v1027 = vunpack.c.l.b16 %v995
      %v1028 = vunpack.c.l.b16 %v996
      %v1029 = vpack.c.b16 %v1014, %v1013
      %v1030 = vpack.c.b16 %v1016, %v1015
      %v1031 = vpack.c.b16 %v1018, %v1017
      %v1032 = vpack.c.b16 %v1020, %v1019
      %v1033 = vpack.c.b16 %v1022, %v1021
      %v1034 = vpack.c.b16 %v1024, %v1023
      %v1035 = vpack.c.b16 %v1026, %v1025
      %v1036 = vpack.c.b16 %v1028, %v1027
      %1045 = vmatpush.bf16.msra.mxu0 %v1036
      %1046 = vmatpush.bf16.msra.mxu0 %v1035
      %1047 = vmatpush.bf16.msra.mxu0 %v1034
      %1048 = vmatpush.bf16.msra.mxu0 %v1033
      %1049 = vmatpush.bf16.msra.mxu0 %v1032
      %1050 = vmatpush.bf16.msra.mxu0 %v1031
      %1051 = vmatpush.bf16.msra.mxu0 %v1030
      %1052 = vmatpush.bf16.msra.mxu0 %v1029
      %1053 = vmatmul.bf16.gmra.mxu0 %v973
      %v1054 = vpop.f32.mrf.mxu0
      %v1055 = vadd.f32 0.0, %v1054
      %v1056 = vpop.f32.mrf.mxu0
      %v1057 = vadd.f32 0.0, %v1056
      %1058 = vmatmul.bf16.gmra.mxu0 %v974
      %v1059 = vpop.f32.mrf.mxu0
      %v1060 = vadd.f32 0.0, %v1059
      %v1061 = vpop.f32.mrf.mxu0
      %v1062 = vadd.f32 0.0, %v1061
      %1063 = vmatmul.bf16.gmra.mxu0 %v975
      %v1064 = vpop.f32.mrf.mxu0
      %v1065 = vadd.f32 0.0, %v1064
      %v1066 = vpop.f32.mrf.mxu0
      %v1067 = vadd.f32 0.0, %v1066
      %1068 = vmatmul.bf16.gmra.mxu0 %v976
      %v1069 = vpop.f32.mrf.mxu0
      %v1070 = vadd.f32 0.0, %v1069
      %v1071 = vpop.f32.mrf.mxu0
      %v1072 = vadd.f32 0.0, %v1071
      %1073 = vmatmul.bf16.gmra.mxu0 %v977
      %v1074 = vpop.f32.mrf.mxu0
      %v1075 = vadd.f32 0.0, %v1074
      %v1076 = vpop.f32.mrf.mxu0
      %v1077 = vadd.f32 0.0, %v1076
      %1078 = vmatmul.bf16.gmra.mxu0 %v978
      %v1079 = vpop.f32.mrf.mxu0
      %v1080 = vadd.f32 0.0, %v1079
      %v1081 = vpop.f32.mrf.mxu0
      %v1082 = vadd.f32 0.0, %v1081
      %1083 = vmatmul.bf16.gmra.mxu0 %v979
      %v1084 = vpop.f32.mrf.mxu0
      %v1085 = vadd.f32 0.0, %v1084
      %v1086 = vpop.f32.mrf.mxu0
      %v1087 = vadd.f32 0.0, %v1086
      %1088 = vmatmul.bf16.gmra.mxu0 %v980
      %v1089 = vpop.f32.mrf.mxu0
      %v1090 = vadd.f32 0.0, %v1089
      %v1091 = vpop.f32.mrf.mxu0
      %v1092 = vadd.f32 0.0, %v1091
      %1093 = vdwg.mxu0
      %v1094 = vld [vmem:[#allocation4] sm:$0xff]
      %v1095 = vld [vmem:[#allocation4 + $0x8] sm:$0xff]
      %v1096 = vld [vmem:[#allocation4 + $0x10] sm:$0xff]
      %v1097 = vld [vmem:[#allocation4 + $0x18] sm:$0xff]
      %v1098 = vld [vmem:[#allocation4 + $0x20] sm:$0xff]
      %v1099 = vld [vmem:[#allocation4 + $0x28] sm:$0xff]
      %v1100 = vld [vmem:[#allocation4 + $0x30] sm:$0xff]
      %v1101 = vld [vmem:[#allocation4 + $0x38] sm:$0xff]
      %v1102 = vld [vmem:[#allocation4 + $0x40] sm:$0xff]
      %v1103 = vld [vmem:[#allocation4 + $0x48] sm:$0xff]
      %v1104 = vld [vmem:[#allocation4 + $0x50] sm:$0xff]
      %v1105 = vld [vmem:[#allocation4 + $0x58] sm:$0xff]
      %v1106 = vld [vmem:[#allocation4 + $0x60] sm:$0xff]
      %v1107 = vld [vmem:[#allocation4 + $0x68] sm:$0xff]
      %v1108 = vld [vmem:[#allocation4 + $0x70] sm:$0xff]
      %v1109 = vld [vmem:[#allocation4 + $0x78] sm:$0xff]
      %1111 = vset.pattern.permute.xlu0 0
      %1112 = vperm.xlu0 %1111, %v717
      %v1113 = vpop.permute.xlu0 %1112
      %1116 = vset.pattern.permute.xlu0 0
      %1117 = vperm.xlu0 %1116, %v719
      %v1118 = vpop.permute.xlu0 %1117
      %1121 = vset.pattern.permute.xlu0 0
      %1122 = vperm.xlu0 %1121, %v721
      %v1123 = vpop.permute.xlu0 %1122
      %1126 = vset.pattern.permute.xlu0 0
      %1127 = vperm.xlu0 %1126, %v723
      %v1128 = vpop.permute.xlu0 %1127
      %1131 = vset.pattern.permute.xlu0 0
      %1132 = vperm.xlu0 %1131, %v725
      %v1133 = vpop.permute.xlu0 %1132
      %1136 = vset.pattern.permute.xlu0 0
      %1137 = vperm.xlu0 %1136, %v727
      %v1138 = vpop.permute.xlu0 %1137
      %1141 = vset.pattern.permute.xlu0 0
      %1142 = vperm.xlu0 %1141, %v729
      %v1143 = vpop.permute.xlu0 %1142
      %1146 = vset.pattern.permute.xlu0 0
      %1147 = vperm.xlu0 %1146, %v731
      %v1148 = vpop.permute.xlu0 %1147
      %1151 = vset.pattern.permute.xlu0 0
      %1152 = vperm.xlu0 %1151, %v733
      %v1153 = vpop.permute.xlu0 %1152
      %1156 = vset.pattern.permute.xlu0 0
      %1157 = vperm.xlu0 %1156, %v735
      %v1158 = vpop.permute.xlu0 %1157
      %1161 = vset.pattern.permute.xlu0 0
      %1162 = vperm.xlu0 %1161, %v737
      %v1163 = vpop.permute.xlu0 %1162
      %1166 = vset.pattern.permute.xlu0 0
      %1167 = vperm.xlu0 %1166, %v739
      %v1168 = vpop.permute.xlu0 %1167
      %1171 = vset.pattern.permute.xlu0 0
      %1172 = vperm.xlu0 %1171, %v741
      %v1173 = vpop.permute.xlu0 %1172
      %1176 = vset.pattern.permute.xlu0 0
      %1177 = vperm.xlu0 %1176, %v743
      %v1178 = vpop.permute.xlu0 %1177
      %1181 = vset.pattern.permute.xlu0 0
      %1182 = vperm.xlu0 %1181, %v745
      %v1183 = vpop.permute.xlu0 %1182
      %1186 = vset.pattern.permute.xlu0 0
      %1187 = vperm.xlu0 %1186, %v747
      %v1188 = vpop.permute.xlu0 %1187
      %v1190 = vmul.f32 %v1113, %v1094
      %v1191 = vmul.f32 %v1118, %v1095
      %v1192 = vmul.f32 %v1123, %v1096
      %v1193 = vmul.f32 %v1128, %v1097
      %v1194 = vmul.f32 %v1133, %v1098
      %v1195 = vmul.f32 %v1138, %v1099
      %v1196 = vmul.f32 %v1143, %v1100
      %v1197 = vmul.f32 %v1148, %v1101
      %v1198 = vmul.f32 %v1153, %v1102
      %v1199 = vmul.f32 %v1158, %v1103
      %v1200 = vmul.f32 %v1163, %v1104
      %v1201 = vmul.f32 %v1168, %v1105
      %v1202 = vmul.f32 %v1173, %v1106
      %v1203 = vmul.f32 %v1178, %v1107
      %v1204 = vmul.f32 %v1183, %v1108
      %v1205 = vmul.f32 %v1188, %v1109
      %v1206 = vadd.f32 %v1190, %v1055
      %v1207 = vadd.f32 %v1191, %v1057
      %v1208 = vadd.f32 %v1192, %v1060
      %v1209 = vadd.f32 %v1193, %v1062
      %v1210 = vadd.f32 %v1194, %v1065
      %v1211 = vadd.f32 %v1195, %v1067
      %v1212 = vadd.f32 %v1196, %v1070
      %v1213 = vadd.f32 %v1197, %v1072
      %v1214 = vadd.f32 %v1198, %v1075
      %v1215 = vadd.f32 %v1199, %v1077
      %v1216 = vadd.f32 %v1200, %v1080
      %v1217 = vadd.f32 %v1201, %v1082
      %v1218 = vadd.f32 %v1202, %v1085
      %v1219 = vadd.f32 %v1203, %v1087
      %v1220 = vadd.f32 %v1204, %v1090
      %v1221 = vadd.f32 %v1205, %v1092
      %1222 = vst [vmem:[#allocation4] sm:$0xff] %v1206
      %1223 = vst [vmem:[#allocation4 + $0x8] sm:$0xff] %v1207
      %1224 = vst [vmem:[#allocation4 + $0x10] sm:$0xff] %v1208
      %1225 = vst [vmem:[#allocation4 + $0x18] sm:$0xff] %v1209
      %1226 = vst [vmem:[#allocation4 + $0x20] sm:$0xff] %v1210
      %1227 = vst [vmem:[#allocation4 + $0x28] sm:$0xff] %v1211
      %1228 = vst [vmem:[#allocation4 + $0x30] sm:$0xff] %v1212
      %1229 = vst [vmem:[#allocation4 + $0x38] sm:$0xff] %v1213
      %1230 = vst [vmem:[#allocation4 + $0x40] sm:$0xff] %v1214
      %1231 = vst [vmem:[#allocation4 + $0x48] sm:$0xff] %v1215
      %1232 = vst [vmem:[#allocation4 + $0x50] sm:$0xff] %v1216
      %1233 = vst [vmem:[#allocation4 + $0x58] sm:$0xff] %v1217
      %1234 = vst [vmem:[#allocation4 + $0x60] sm:$0xff] %v1218
      %1235 = vst [vmem:[#allocation4 + $0x68] sm:$0xff] %v1219
      %1236 = vst [vmem:[#allocation4 + $0x70] sm:$0xff] %v1220
      %1237 = vst [vmem:[#allocation4 + $0x78] sm:$0xff] %v1221
      %1238 = vst.msk [vmem:[#allocation2] sm:$0xff] %vm956, %v684
      %1239 = vst.msk [vmem:[#allocation2 + $0x8] sm:$0xff] %vm956, %v685
      %1240 = vst.msk [vmem:[#allocation2 + $0x10] sm:$0xff] %vm956, %v686
      %1241 = vst.msk [vmem:[#allocation2 + $0x18] sm:$0xff] %vm956, %v687
      %1242 = vst.msk [vmem:[#allocation2 + $0x20] sm:$0xff] %vm956, %v688
      %1243 = vst.msk [vmem:[#allocation2 + $0x28] sm:$0xff] %vm956, %v689
      %1244 = vst.msk [vmem:[#allocation2 + $0x30] sm:$0xff] %vm956, %v690
      %1245 = vst.msk [vmem:[#allocation2 + $0x38] sm:$0xff] %vm956, %v691
      %1246 = vst.msk [vmem:[#allocation2 + $0x40] sm:$0xff] %vm956, %v692
      %1247 = vst.msk [vmem:[#allocation2 + $0x48] sm:$0xff] %vm956, %v693
      %1248 = vst.msk [vmem:[#allocation2 + $0x50] sm:$0xff] %vm956, %v694
      %1249 = vst.msk [vmem:[#allocation2 + $0x58] sm:$0xff] %vm956, %v695
      %1250 = vst.msk [vmem:[#allocation2 + $0x60] sm:$0xff] %vm956, %v696
      %1251 = vst.msk [vmem:[#allocation2 + $0x68] sm:$0xff] %vm956, %v697
      %1252 = vst.msk [vmem:[#allocation2 + $0x70] sm:$0xff] %vm956, %v698
      %1253 = vst.msk [vmem:[#allocation2 + $0x78] sm:$0xff] %vm956, %v699
      %p1254 = scmp.eq.s32.totalorder %s24, 1
      // Predicated region
      $region49: #{nl_block_pallas.3} parent=43 // pred_check
        %p1255 = pneg %p1254
      $region50: #{nl_block_pallas.3} parent=43 // pred_check_branch
        %1257 = sbr.rel (%p1255) target = $region52
      $region51: #{nl_block_pallas.3} parent=43 // pred_region
        %v1258 = vld [vmem:[#allocation3] sm:$0xff]
        %v1259 = vld [vmem:[#allocation3 + $0x8] sm:$0xff]
        %v1260 = vld [vmem:[#allocation3 + $0x10] sm:$0xff]
        %v1261 = vld [vmem:[#allocation3 + $0x18] sm:$0xff]
        %v1262 = vld [vmem:[#allocation3 + $0x20] sm:$0xff]
        %v1263 = vld [vmem:[#allocation3 + $0x28] sm:$0xff]
        %v1264 = vld [vmem:[#allocation3 + $0x30] sm:$0xff]
        %v1265 = vld [vmem:[#allocation3 + $0x38] sm:$0xff]
        %v1266 = vld [vmem:[#allocation3 + $0x40] sm:$0xff]
        %v1267 = vld [vmem:[#allocation3 + $0x48] sm:$0xff]
        %v1268 = vld [vmem:[#allocation3 + $0x50] sm:$0xff]
        %v1269 = vld [vmem:[#allocation3 + $0x58] sm:$0xff]
        %v1270 = vld [vmem:[#allocation3 + $0x60] sm:$0xff]
        %v1271 = vld [vmem:[#allocation3 + $0x68] sm:$0xff]
        %v1272 = vld [vmem:[#allocation3 + $0x70] sm:$0xff]
        %v1273 = vld [vmem:[#allocation3 + $0x78] sm:$0xff]
        %v1274 = vrcp.pop %v1258
        %v1275 = vrcp.pop %v1259
        %v1276 = vrcp.pop %v1260
        %v1277 = vrcp.pop %v1261
        %v1278 = vrcp.pop %v1262
        %v1279 = vrcp.pop %v1263
        %v1280 = vrcp.pop %v1264
        %v1281 = vrcp.pop %v1265
        %v1282 = vrcp.pop %v1266
        %v1283 = vrcp.pop %v1267
        %v1284 = vrcp.pop %v1268
        %v1285 = vrcp.pop %v1269
        %v1286 = vrcp.pop %v1270
        %v1287 = vrcp.pop %v1271
        %v1288 = vrcp.pop %v1272
        %v1289 = vrcp.pop %v1273
        %v1290 = vld [vmem:[#allocation4] sm:$0xff]
        %v1291 = vld [vmem:[#allocation4 + $0x8] sm:$0xff]
        %v1292 = vld [vmem:[#allocation4 + $0x10] sm:$0xff]
        %v1293 = vld [vmem:[#allocation4 + $0x18] sm:$0xff]
        %v1294 = vld [vmem:[#allocation4 + $0x20] sm:$0xff]
        %v1295 = vld [vmem:[#allocation4 + $0x28] sm:$0xff]
        %v1296 = vld [vmem:[#allocation4 + $0x30] sm:$0xff]
        %v1297 = vld [vmem:[#allocation4 + $0x38] sm:$0xff]
        %v1298 = vld [vmem:[#allocation4 + $0x40] sm:$0xff]
        %v1299 = vld [vmem:[#allocation4 + $0x48] sm:$0xff]
        %v1300 = vld [vmem:[#allocation4 + $0x50] sm:$0xff]
        %v1301 = vld [vmem:[#allocation4 + $0x58] sm:$0xff]
        %v1302 = vld [vmem:[#allocation4 + $0x60] sm:$0xff]
        %v1303 = vld [vmem:[#allocation4 + $0x68] sm:$0xff]
        %v1304 = vld [vmem:[#allocation4 + $0x70] sm:$0xff]
        %v1305 = vld [vmem:[#allocation4 + $0x78] sm:$0xff]
        %1307 = vset.pattern.permute.xlu0 0
        %1308 = vperm.xlu0 %1307, %v1274
        %v1309 = vpop.permute.xlu0 %1308
        %1312 = vset.pattern.permute.xlu0 0
        %1313 = vperm.xlu0 %1312, %v1275
        %v1314 = vpop.permute.xlu0 %1313
        %1317 = vset.pattern.permute.xlu0 0
        %1318 = vperm.xlu0 %1317, %v1276
        %v1319 = vpop.permute.xlu0 %1318
        %1322 = vset.pattern.permute.xlu0 0
        %1323 = vperm.xlu0 %1322, %v1277
        %v1324 = vpop.permute.xlu0 %1323
        %1327 = vset.pattern.permute.xlu0 0
        %1328 = vperm.xlu0 %1327, %v1278
        %v1329 = vpop.permute.xlu0 %1328
        %1332 = vset.pattern.permute.xlu0 0
        %1333 = vperm.xlu0 %1332, %v1279
        %v1334 = vpop.permute.xlu0 %1333
        %1337 = vset.pattern.permute.xlu0 0
        %1338 = vperm.xlu0 %1337, %v1280
        %v1339 = vpop.permute.xlu0 %1338
        %1342 = vset.pattern.permute.xlu0 0
        %1343 = vperm.xlu0 %1342, %v1281
        %v1344 = vpop.permute.xlu0 %1343
        %1347 = vset.pattern.permute.xlu0 0
        %1348 = vperm.xlu0 %1347, %v1282
        %v1349 = vpop.permute.xlu0 %1348
        %1352 = vset.pattern.permute.xlu0 0
        %1353 = vperm.xlu0 %1352, %v1283
        %v1354 = vpop.permute.xlu0 %1353
        %1357 = vset.pattern.permute.xlu0 0
        %1358 = vperm.xlu0 %1357, %v1284
        %v1359 = vpop.permute.xlu0 %1358
        %1362 = vset.pattern.permute.xlu0 0
        %1363 = vperm.xlu0 %1362, %v1285
        %v1364 = vpop.permute.xlu0 %1363
        %1367 = vset.pattern.permute.xlu0 0
        %1368 = vperm.xlu0 %1367, %v1286
        %v1369 = vpop.permute.xlu0 %1368
        %1372 = vset.pattern.permute.xlu0 0
        %1373 = vperm.xlu0 %1372, %v1287
        %v1374 = vpop.permute.xlu0 %1373
        %1377 = vset.pattern.permute.xlu0 0
        %1378 = vperm.xlu0 %1377, %v1288
        %v1379 = vpop.permute.xlu0 %1378
        %1382 = vset.pattern.permute.xlu0 0
        %1383 = vperm.xlu0 %1382, %v1289
        %v1384 = vpop.permute.xlu0 %1383
        %v1386 = vmul.f32 %v1290, %v1309
        %v1387 = vmul.f32 %v1291, %v1314
        %v1388 = vmul.f32 %v1292, %v1319
        %v1389 = vmul.f32 %v1293, %v1324
        %v1390 = vmul.f32 %v1294, %v1329
        %v1391 = vmul.f32 %v1295, %v1334
        %v1392 = vmul.f32 %v1296, %v1339
        %v1393 = vmul.f32 %v1297, %v1344
        %v1394 = vmul.f32 %v1298, %v1349
        %v1395 = vmul.f32 %v1299, %v1354
        %v1396 = vmul.f32 %v1300, %v1359
        %v1397 = vmul.f32 %v1301, %v1364
        %v1398 = vmul.f32 %v1302, %v1369
        %v1399 = vmul.f32 %v1303, %v1374
        %v1400 = vmul.f32 %v1304, %v1379
        %v1401 = vmul.f32 %v1305, %v1384
        %v1402 = vpack.c.bf16 %v1387, %v1386
        %v1403 = vpack.c.bf16 %v1389, %v1388
        %v1404 = vpack.c.bf16 %v1391, %v1390
        %v1405 = vpack.c.bf16 %v1393, %v1392
        %v1406 = vpack.c.bf16 %v1395, %v1394
        %v1407 = vpack.c.bf16 %v1397, %v1396
        %v1408 = vpack.c.bf16 %v1399, %v1398
        %v1409 = vpack.c.bf16 %v1401, %v1400
        %v1410 = vld [vmem:[%s4] sm:$0xf]
        %v1411 = vld [vmem:[%s4 + $0x4] sm:$0xf]
        %v1412 = vld [vmem:[%s4 + $0x8] sm:$0xf]
        %v1413 = vld [vmem:[%s4 + $0xc] sm:$0xf]
        %v1414 = vld [vmem:[%s4 + $0x10] sm:$0xf]
        %v1415 = vld [vmem:[%s4 + $0x14] sm:$0xf]
        %v1416 = vld [vmem:[%s4 + $0x18] sm:$0xf]
        %v1417 = vld [vmem:[%s4 + $0x1c] sm:$0xf]
        %v1418 = vld [vmem:[%s4 + $0x20] sm:$0xf]
        %v1419 = vld [vmem:[%s4 + $0x24] sm:$0xf]
        %v1420 = vld [vmem:[%s4 + $0x28] sm:$0xf]
        %v1421 = vld [vmem:[%s4 + $0x2c] sm:$0xf]
        %v1422 = vld [vmem:[%s4 + $0x30] sm:$0xf]
        %v1423 = vld [vmem:[%s4 + $0x34] sm:$0xf]
        %v1424 = vld [vmem:[%s4 + $0x38] sm:$0xf]
        %v1425 = vld [vmem:[%s4 + $0x3c] sm:$0xf]
        %v1426 = vld [vmem:[%s5] sm:$0x1]
        %v1428 = vperm.slane %v1426, 0
        %v1446 = vunpack.c.l.b16 %v1410
        %v1447 = vunpack.c.l.b16 %v1411
        %v1448 = vunpack.c.l.b16 %v1412
        %v1449 = vunpack.c.l.b16 %v1413
        %v1450 = vunpack.c.l.b16 %v1414
        %v1451 = vunpack.c.l.b16 %v1415
        %v1452 = vunpack.c.l.b16 %v1416
        %v1453 = vunpack.c.l.b16 %v1417
        %v1454 = vunpack.c.l.b16 %v1418
        %v1455 = vunpack.c.l.b16 %v1419
        %v1456 = vunpack.c.l.b16 %v1420
        %v1457 = vunpack.c.l.b16 %v1421
        %v1458 = vunpack.c.l.b16 %v1422
        %v1459 = vunpack.c.l.b16 %v1423
        %v1460 = vunpack.c.l.b16 %v1424
        %v1461 = vunpack.c.l.b16 %v1425
        %v1462 = vpack.c.b16 %v1447, %v1446
        %v1463 = vpack.c.b16 %v1449, %v1448
        %v1464 = vpack.c.b16 %v1451, %v1450
        %v1465 = vpack.c.b16 %v1453, %v1452
        %v1466 = vpack.c.b16 %v1455, %v1454
        %v1467 = vpack.c.b16 %v1457, %v1456
        %v1468 = vpack.c.b16 %v1459, %v1458
        %v1469 = vpack.c.b16 %v1461, %v1460
        %1478 = vmatpush.bf16.msra.mxu0 %v1469
        %1479 = vmatpush.bf16.msra.mxu0 %v1468
        %1480 = vmatpush.bf16.msra.mxu0 %v1467
        %1481 = vmatpush.bf16.msra.mxu0 %v1466
        %1482 = vmatpush.bf16.msra.mxu0 %v1465
        %1483 = vmatpush.bf16.msra.mxu0 %v1464
        %1484 = vmatpush.bf16.msra.mxu0 %v1463
        %1485 = vmatpush.bf16.msra.mxu0 %v1462
        %1486 = vmatmul.bf16.gmra.mxu0 %v1402
        %v1487 = vpop.f32.mrf.mxu0
        %v1488 = vadd.f32 %v1428, %v1487
        %v1489 = vpop.f32.mrf.mxu0
        %v1490 = vadd.f32 %v1428, %v1489
        %1491 = vmatmul.bf16.gmra.mxu0 %v1403
        %v1492 = vpop.f32.mrf.mxu0
        %v1493 = vadd.f32 %v1428, %v1492
        %v1494 = vpop.f32.mrf.mxu0
        %v1495 = vadd.f32 %v1428, %v1494
        %1496 = vmatmul.bf16.gmra.mxu0 %v1404
        %v1497 = vpop.f32.mrf.mxu0
        %v1498 = vadd.f32 %v1428, %v1497
        %v1499 = vpop.f32.mrf.mxu0
        %v1500 = vadd.f32 %v1428, %v1499
        %1501 = vmatmul.bf16.gmra.mxu0 %v1405
        %v1502 = vpop.f32.mrf.mxu0
        %v1503 = vadd.f32 %v1428, %v1502
        %v1504 = vpop.f32.mrf.mxu0
        %v1505 = vadd.f32 %v1428, %v1504
        %1506 = vmatmul.bf16.gmra.mxu0 %v1406
        %v1507 = vpop.f32.mrf.mxu0
        %v1508 = vadd.f32 %v1428, %v1507
        %v1509 = vpop.f32.mrf.mxu0
        %v1510 = vadd.f32 %v1428, %v1509
        %1511 = vmatmul.bf16.gmra.mxu0 %v1407
        %v1512 = vpop.f32.mrf.mxu0
        %v1513 = vadd.f32 %v1428, %v1512
        %v1514 = vpop.f32.mrf.mxu0
        %v1515 = vadd.f32 %v1428, %v1514
        %1516 = vmatmul.bf16.gmra.mxu0 %v1408
        %v1517 = vpop.f32.mrf.mxu0
        %v1518 = vadd.f32 %v1428, %v1517
        %v1519 = vpop.f32.mrf.mxu0
        %v1520 = vadd.f32 %v1428, %v1519
        %1521 = vmatmul.bf16.gmra.mxu0 %v1409
        %v1522 = vpop.f32.mrf.mxu0
        %v1523 = vadd.f32 %v1428, %v1522
        %v1524 = vpop.f32.mrf.mxu0
        %v1525 = vadd.f32 %v1428, %v1524
        %1526 = vdwg.mxu0
        %v1527 = vld [vmem:[%s394] sm:$0xff]
        %v1528 = vld [vmem:[%s394 + $0x8] sm:$0xff]
        %v1529 = vld [vmem:[%s394 + $0x10] sm:$0xff]
        %v1530 = vld [vmem:[%s394 + $0x18] sm:$0xff]
        %v1531 = vld [vmem:[%s394 + $0x20] sm:$0xff]
        %v1532 = vld [vmem:[%s394 + $0x28] sm:$0xff]
        %v1533 = vld [vmem:[%s394 + $0x30] sm:$0xff]
        %v1534 = vld [vmem:[%s394 + $0x38] sm:$0xff]
        %v1535 = vld [vmem:[%s394 + $0x40] sm:$0xff]
        %v1536 = vld [vmem:[%s394 + $0x48] sm:$0xff]
        %v1537 = vld [vmem:[%s394 + $0x50] sm:$0xff]
        %v1538 = vld [vmem:[%s394 + $0x58] sm:$0xff]
        %v1539 = vld [vmem:[%s394 + $0x60] sm:$0xff]
        %v1540 = vld [vmem:[%s394 + $0x68] sm:$0xff]
        %v1541 = vld [vmem:[%s394 + $0x70] sm:$0xff]
        %v1542 = vld [vmem:[%s394 + $0x78] sm:$0xff]
        %v1543 = vadd.f32 %v1488, %v1527
        %v1544 = vadd.f32 %v1490, %v1528
        %v1545 = vadd.f32 %v1493, %v1529
        %v1546 = vadd.f32 %v1495, %v1530
        %v1547 = vadd.f32 %v1498, %v1531
        %v1548 = vadd.f32 %v1500, %v1532
        %v1549 = vadd.f32 %v1503, %v1533
        %v1550 = vadd.f32 %v1505, %v1534
        %v1551 = vadd.f32 %v1508, %v1535
        %v1552 = vadd.f32 %v1510, %v1536
        %v1553 = vadd.f32 %v1513, %v1537
        %v1554 = vadd.f32 %v1515, %v1538
        %v1555 = vadd.f32 %v1518, %v1539
        %v1556 = vadd.f32 %v1520, %v1540
        %v1557 = vadd.f32 %v1523, %v1541
        %v1558 = vadd.f32 %v1525, %v1542
        %1559 = vst [vmem:[%s404] sm:$0xff] %v1543
        %1560 = vst [vmem:[%s404 + $0x8] sm:$0xff] %v1544
        %1561 = vst [vmem:[%s404 + $0x10] sm:$0xff] %v1545
        %1562 = vst [vmem:[%s404 + $0x18] sm:$0xff] %v1546
        %1563 = vst [vmem:[%s404 + $0x20] sm:$0xff] %v1547
        %1564 = vst [vmem:[%s404 + $0x28] sm:$0xff] %v1548
        %1565 = vst [vmem:[%s404 + $0x30] sm:$0xff] %v1549
        %1566 = vst [vmem:[%s404 + $0x38] sm:$0xff] %v1550
        %1567 = vst [vmem:[%s404 + $0x40] sm:$0xff] %v1551
        %1568 = vst [vmem:[%s404 + $0x48] sm:$0xff] %v1552
        %1569 = vst [vmem:[%s404 + $0x50] sm:$0xff] %v1553
        %1570 = vst [vmem:[%s404 + $0x58] sm:$0xff] %v1554
        %1571 = vst [vmem:[%s404 + $0x60] sm:$0xff] %v1555
        %1572 = vst [vmem:[%s404 + $0x68] sm:$0xff] %v1556
        %1573 = vst [vmem:[%s404 + $0x70] sm:$0xff] %v1557
        %1574 = vst [vmem:[%s404 + $0x78] sm:$0xff] %v1558
      $region52: #{nl_block_pallas.3} parent=43 // pred_fallthru
        _
      %s1575 = smul.u32 16, %s23
      %p1576 = scmp.lt.s32.totalorder %s22, 1
      %s1577 = scalar_select %p1576, %s22, 1
      %p1578 = scmp.lt.s32.totalorder %s1575, 31
      %s1579 = scalar_select %p1578, %s1575, 31
      %s1580 = smul.addr %s1577, 32
      %s1581 = sadd.s32 %s1579, %s1580
      %s1582 = smul.addr %s1581, 8
      %s1583 = scalar_lea.vmem %s6, %s1582
      // Predicated region
      $region53: #{nl_block_pallas.3} parent=43 // pred_check
        %p1584 = pneg %p210
      $region54: #{nl_block_pallas.3} parent=43 // pred_check_branch
        %1586 = sbr.rel (%p1584) target = $region56
      $region55: #{nl_block_pallas.3} parent=43 // pred_region
        %s1587 = smul.u32 16, %s23
      $region56: #{nl_block_pallas.3} parent=43 // pred_fallthru
        _
    $region44: #{nl_block_pallas.3} parent=5 // pred_fallthru
      _
    %p1588 = scmp.le.s32.totalorder 2, %s12
    // Predicated region
    $region57: #{nl_block_pallas.3} parent=5 // pred_check
      %p1589 = pneg %p1588
    $region58: #{nl_block_pallas.3} parent=5 // pred_check_branch
      %1591 = sbr.rel (%p1589) target = $region60
    $region59: #{nl_block_pallas.3} parent=5 // pred_region
      %s1592 = ssub.s32 %s12, 2
      // Predicated region
      $region61: #{nl_block_pallas.3} parent=59 // pred_check
        %p1593 = pneg %p216
      $region62: #{nl_block_pallas.3} parent=59 // pred_check_branch
        %1595 = sbr.rel (%p1593) target = $region64
      $region63: #{nl_block_pallas.3} parent=59 // pred_region
        %s1596 = smul.u32 16, %s26
        %p1597 = scmp.lt.s32.totalorder %s25, 1
        %s1598 = scalar_select %p1597, %s25, 1
        %p1599 = scmp.lt.s32.totalorder %s1596, 31
        %s1600 = scalar_select %p1599, %s1596, 31
        %s1601 = smul.addr %s1598, 32
        %s1602 = sadd.s32 %s1600, %s1601
        %s1603 = smul.addr %s1602, 8
        %s1604 = scalar_lea.vmem %s6, %s1603
      $region64: #{nl_block_pallas.3} parent=59 // pred_fallthru
        _
    $region60: #{nl_block_pallas.3} parent=5 // pred_fallthru
      _
  $region6: #{nl_block_pallas.3} parent=0 // loop_footer
    %s16 = sadd.s32 1, %s12
  $region7: #{nl_block_pallas.3} parent=0 // loop_footer_branch
    %11 = sbr.rel target = $region3
  $region8: #{nl_block_pallas.3} parent=0 // loop_exit
    _

</llo_original>
